<compile_context>
chip_gen: v6e
topology: v6e:2x2x1
jax: 0.10.0
libtpu: 0.0.40
codegen_flags: <defaults>
</compile_context>

<pallas_src>
import jax
import jax.numpy as jnp
from jax.experimental import pallas as pl
from jax.experimental.pallas import tpu as pltpu

PAD_IDX = 0
LANE = 128
NEG_BIG = -1e30  # "minus infinity" that stays NaN-free through max/exp (keep in f32!)


# ----------------------------------------------------------------------------------
# small helpers (host side)
# ----------------------------------------------------------------------------------
def _round_up(x, m):
    return ((x + m - 1) // m) * m


def _pad2(w, rows, cols):
    out = jnp.zeros((rows, cols), w.dtype)
    return out.at[: w.shape[0], : w.shape[1]].set(w)


def _pad_last(x, n):
    pad = n - x.shape[-1]
    if pad == 0:
        return x
    return jnp.pad(x, [(0, 0)] * (x.ndim - 1) + [(0, pad)])


def _pad_rows(x, n):
    if n == x.shape[0]:
        return x
    return jnp.pad(x, ((0, n - x.shape[0]), (0, 0)))


def _vmem_cap_bytes(frac=0.8):
    """~80% of physical VMEM (headroom for compiler scratch); conservative fallback."""
    try:
        return int(pltpu.get_tpu_info().vmem_capacity_bytes * frac)
    except Exception:
        return 48 * 1024 * 1024


# ----------------------------------------------------------------------------------
# Kernel 1: att_projection  -- row-tiled (rows, 2Hp) @ (2Hp, Hp) + bias
# ----------------------------------------------------------------------------------
def att_proj_kernel(vc_ref, w_ref, b_ref, out_ref):
    out_ref[...] = (
        jnp.dot(vc_ref[...].astype(w_ref.dtype), w_ref[...],
                preferred_element_type=jnp.float32)
        + b_ref[...]
    )


# ----------------------------------------------------------------------------------
# Kernel 2: Tc fused decoder timesteps per grid step (sequential recurrence).
#   grid = (batch_split, time_chunks); axis 1 is the serial recurrence.
# ----------------------------------------------------------------------------------
def decode_step_kernel(y_ref, h0_ref, c0_ref, ep_ref, vc_ref,
                       wio_ref, wiy_ref, whh_ref, wua_ref, wuh_ref,
                       out_ref, h_s, c_s, o_s):
    @pl.when(pl.program_id(1) == 0)
    def _():
        h_s[...] = h0_ref[...]
        c_s[...] = c0_ref[...]
        o_s[...] = jnp.zeros_like(o_s)

    hp = h_s.shape[-1]
    tc = y_ref.shape[0]
    wdt = wio_ref.dtype
    ep = ep_ref[...]                                                 # (Bh, S, Hp)
    vc = vc_ref[...]                                                 # (Bh, S, 2Hp)
    # TODO(synk): for very long S, stream ep/vc in chunks from HBM (pl.ANY + manual DMA)
    # with an online softmax instead of holding the full context resident.

    def step(i, carry):
        h, c, o = carry
        y_t = y_ref[i]                                               # (Bh, Ep)

        # LSTMCell (bias=False): input is cat(o_prev, Y_t); split weight avoids concat.
        gates = (
            jnp.dot(o.astype(wdt), wio_ref[...], preferred_element_type=jnp.float32)
            + jnp.dot(y_t.astype(wdt), wiy_ref[...], preferred_element_type=jnp.float32)
            + jnp.dot(h.astype(wdt), whh_ref[...], preferred_element_type=jnp.float32)
        )                                                            # (Bh, 4Hp) i,f,g,o
        i_g = jax.nn.sigmoid(gates[:, 0 * hp:1 * hp])
        f_g = jax.nn.sigmoid(gates[:, 1 * hp:2 * hp])
        g_g = jnp.tanh(gates[:, 2 * hp:3 * hp])
        o_g = jax.nn.sigmoid(gates[:, 3 * hp:4 * hp])
        c_new = f_g * c + i_g * g_g
        h_new = o_g * jnp.tanh(c_new)

        # attention scores on the VPU/XLU (gate matmuls own the MXU; an N=1 matvec on
        # the MXU has near-zero occupancy and would serialize the per-step critical path)
        e_t = jnp.sum(ep * h_new[:, None, :], axis=-1)               # (Bh, S)
        m = jnp.max(e_t, axis=-1, keepdims=True)
        p = jnp.exp(e_t - m)
        alpha = p * pl.reciprocal(jnp.sum(p, axis=-1, keepdims=True), approx=False)
        a_t = jnp.einsum('bqs,bsk->bqk', alpha[:, None, :], vc,
                         preferred_element_type=jnp.float32)[:, 0, :]  # (Bh, 2Hp)

        # combined_output_projection (bias=False) on cat(a_t, h_new) via split weight
        v_t = (jnp.dot(a_t.astype(wdt), wua_ref[...], preferred_element_type=jnp.float32)
               + jnp.dot(h_new.astype(wdt), wuh_ref[...],
                         preferred_element_type=jnp.float32))
        o_t = jnp.tanh(v_t)                        # dropout == identity (eval mode)
        out_ref[i] = o_t.astype(out_ref.dtype)
        return (h_new, c_new, o_t)

    h, c, o = jax.lax.fori_loop(0, tc, step,
                                (h_s[...], c_s[...], o_s[...]), unroll=True)
    h_s[...] = h
    c_s[...] = c
    o_s[...] = o


# ----------------------------------------------------------------------------------
# Kernel 3: (T*B rows) x (vocab tiles) scoring.
#   online logsumexp across vocab tiles + in-kernel gold gather (iota == gold_idx),
#   per-row pad-masked gold log-prob emitted at the last vocab tile.
# ----------------------------------------------------------------------------------
def score_kernel(comb_ref, wv_ref, bv_ref, gold_ref, out_ref, m_s, l_s, g_s):
    v = pl.program_id(1)
    tv = wv_ref.shape[-1]
    tr = comb_ref.shape[0]

    @pl.when(v == 0)
    def _():
        m_s[...] = jnp.full_like(m_s, NEG_BIG)
        l_s[...] = jnp.zeros_like(l_s)
        g_s[...] = jnp.zeros_like(g_s)

    logits = (
        jnp.dot(comb_ref[...].astype(wv_ref.dtype), wv_ref[...],
                preferred_element_type=jnp.float32)
        + bv_ref[...]
    )                                                                # (TR, TV)

    # online logsumexp accumulation
    m_prev = m_s[...]
    m_new = jnp.maximum(m_prev, jnp.max(logits, axis=-1, keepdims=True))
    l_s[...] = (l_s[...] * jnp.exp(m_prev - m_new)
                + jnp.sum(jnp.exp(logits - m_new), axis=-1, keepdims=True))
    m_s[...] = m_new

    # gold-word logit gather, expressed as an iota==gold compare (no one-hot input)
    gold = gold_ref[...]                                             # (TR, 1) int32
    col = jax.lax.broadcasted_iota(jnp.int32, (tr, tv), 1) + v * tv
    g_s[...] += jnp.sum(jnp.where(col == gold, logits, 0.0),
                        axis=-1, keepdims=True)

    @pl.when(v == pl.num_programs(1) - 1)
    def _():
        lse = m_s[...] + jnp.log(l_s[...])
        mask = (gold != PAD_IDX).astype(jnp.float32)
        out_ref[...] = (g_s[...] - lse) * mask                       # (TR, 1)


# ----------------------------------------------------------------------------------
# Wrapper
# ----------------------------------------------------------------------------------
def rnn_decoder_forward(params, dec_init_state, visual_context, target_padded,
                        *, time_chunk=8):
    h0, c0 = dec_init_state
    T_full, B = target_padded.shape
    T = T_full - 1
    S = visual_context.shape[1]
    Hp, Ep = params["Hp"], params["Ep"]
    Vp, TV = params["Vp"], params["TV"]
    f32 = jnp.float32
    mm_dtype = params["w_hh_T"].dtype
    wbytes = jnp.dtype(mm_dtype).itemsize
    vmem_cap = _vmem_cap_bytes()

    # batch padding (sublane-dense per-step blocks) + optional 2-way megacore split
    sub_mm = max(8, 32 // wbytes)                 # sublane unit of the matmul dtype
    B_p = _round_up(B, 8)
    n_bs = 2 if (B_p % (2 * sub_mm) == 0) else 1  # v7x megacore; serial no-op on 1 TC
    Bh = B_p // n_bs

    # zero-pad runtime activations to lane-dense feature dims (exactness-preserving)
    h0p = _pad_rows(_pad_last(h0, Hp), B_p)
    c0p = _pad_rows(_pad_last(c0, Hp), B_p)
    vcp = _pad_last(visual_context, 2 * Hp)
    if B_p != B:
        vcp = jnp.pad(vcp, ((0, B_p - B), (0, 0), (0, 0)))

    # embedding lookup (glue); time axis padded up to a multiple of the fused chunk
    Tc = max(1, min(time_chunk, T))
    T_p = _round_up(T, Tc)
    n_chunks = T_p // Tc
    Y = params["emb"][target_padded[:-1]].astype(f32)                # (T, B, Ep)
    Y = jnp.pad(Y, ((0, T_p - T), (0, B_p - B), (0, 0)))

    # --- att_projection (Pallas, row-tiled, HBM-streaming) ---
    rows = B_p * S
    TRa = min(1024, _round_up(rows, 8))
    rows_p = _round_up(rows, TRa)
    vc_flat = _pad_rows(vcp.reshape(rows, 2 * Hp), rows_p)
    att_cost = pl.CostEstimate(
        flops=int(2 * rows_p * 2 * Hp * Hp), transcendentals=0,
        bytes_accessed=int(4 * rows_p * 2 * Hp + wbytes * 2 * Hp * Hp
                           + 4 * Hp + 4 * rows_p * Hp))
    att_blk = TRa * 2 * Hp * 4 + 2 * Hp * Hp * wbytes + Hp * 4 + TRa * Hp * 4
    att_vmem = int(min(vmem_cap, max(32 << 20, 2 * att_blk + (4 << 20))))
    enc_proj = pl.pallas_call(
        att_proj_kernel,
        out_shape=jax.ShapeDtypeStruct((rows_p, Hp), f32),
        grid=(rows_p // TRa,),
        in_specs=[
            pl.BlockSpec((TRa, 2 * Hp), lambda r: (r, 0)),
            pl.BlockSpec((2 * Hp, Hp), lambda r: (0, 0)),
            pl.BlockSpec((1, Hp), lambda r: (0, 0)),
        ],
        out_specs=pl.BlockSpec((TRa, Hp), lambda r: (r, 0)),
        compiler_params=pltpu.CompilerParams(
            dimension_semantics=("parallel",), vmem_limit_bytes=att_vmem),
        cost_estimate=att_cost,
    )(vc_flat, params["w_att_T"], params["b_att"])
    enc_proj = enc_proj[:rows].reshape(B_p, S, Hp)

    # --- recurrent decode loop (Pallas, Tc fused steps per grid iteration) ---
    dec_blk = (Tc * Bh * Ep * 4 + 2 * Bh * Hp * 4
               + Bh * S * Hp * 4 + Bh * S * 2 * Hp * 4
               + (2 * Hp * 4 * Hp + Ep * 4 * Hp + 2 * Hp * Hp + Hp * Hp) * wbytes
               + Tc * Bh * Hp * 4)
    dec_vmem = int(min(vmem_cap,
                       max(32 << 20,
                           2 * dec_blk + 3 * Bh * Hp * 4 + Bh * S * Hp * 4 + (8 << 20))))

    def _decode(use_buffered):
        if use_buffered:
            # grid-invariant operands: single-buffer -> halve their VMEM footprint
            inv = lambda shape, imap: pl.BlockSpec(shape, imap,
                                                   pipeline_mode=pl.Buffered(1))
        else:
            inv = pl.BlockSpec
        return pl.pallas_call(
            decode_step_kernel,
            out_shape=jax.ShapeDtypeStruct((T_p, B_p, Hp), f32),
            grid=(n_bs, n_chunks),
            in_specs=[
                pl.BlockSpec((Tc, Bh, Ep), lambda b, c: (c, b, 0)),
                inv((Bh, Hp), lambda b, c: (b, 0)),
                inv((Bh, Hp), lambda b, c: (b, 0)),
                inv((Bh, S, Hp), lambda b, c: (b, 0, 0)),
                inv((Bh, S, 2 * Hp), lambda b, c: (b, 0, 0)),
                inv((Hp, 4 * Hp), lambda b, c: (0, 0)),
                inv((Ep, 4 * Hp), lambda b, c: (0, 0)),
                inv((Hp, 4 * Hp), lambda b, c: (0, 0)),
                inv((2 * Hp, Hp), lambda b, c: (0, 0)),
                inv((Hp, Hp), lambda b, c: (0, 0)),
            ],
            out_specs=pl.BlockSpec((Tc, Bh, Hp), lambda b, c: (c, b, 0)),
            scratch_shapes=[
                pltpu.VMEM((Bh, Hp), f32),    # h state
                pltpu.VMEM((Bh, Hp), f32),    # c state
                pltpu.VMEM((Bh, Hp), f32),    # o_prev
            ],
            compiler_params=pltpu.CompilerParams(
                dimension_semantics=("parallel", "arbitrary"),
                vmem_limit_bytes=dec_vmem),
        )(Y, h0p, c0p, enc_proj, vcp,
          params["w_ih_o_T"], params["w_ih_y_T"], params["w_hh_T"],
          params["w_u_a_T"], params["w_u_h_T"])

    try:
        combined = _decode(True)
    except Exception:
        # pipeline_mode=pl.Buffered(1) unsupported in this JAX build -> default buffering
        combined = _decode(False)

    # --- scoring: flatten to (T*B, Hp) rows, tile the vocab dimension (innermost) ---
    combined = combined[:T, :B]                                      # drop padding
    gold_idx = target_padded[1:]                                     # (T, B)
    ROWS = T * B
    TR = min(_round_up(512, sub_mm), _round_up(ROWS, sub_mm))
    ROWS_P = _round_up(ROWS, TR)
    n_rt = ROWS_P // TR
    n_vt = Vp // TV

    comb_flat = _pad_rows(combined.reshape(ROWS, Hp), ROWS_P).astype(mm_dtype)
    cbytes = jnp.dtype(comb_flat.dtype).itemsize
    gold_flat = jnp.pad(gold_idx.reshape(ROWS, 1).astype(jnp.int32),
                        ((0, ROWS_P - ROWS), (0, 0)),
                        constant_values=PAD_IDX)

    sc_cost = pl.CostEstimate(
        flops=int(2 * ROWS_P * Hp * Vp),
        transcendentals=int(ROWS_P * Vp),
        bytes_accessed=int(cbytes * ROWS_P * Hp + n_rt * Hp * Vp * wbytes
                           + 4 * (Vp + 2 * ROWS_P)))
    sc_blk = TR * Hp * cbytes + Hp * TV * wbytes + TV * 4 + TR * 4
    sc_vmem = int(min(vmem_cap,
                      max(32 << 20, 2 * sc_blk + TR * TV * 4 + 4 * TR * 4 + (8 << 20))))

    gold_logp = pl.pallas_call(
        score_kernel,
        out_shape=jax.ShapeDtypeStruct((ROWS_P, 1), f32),
        grid=(n_rt, n_vt),
        in_specs=[
            pl.BlockSpec((TR, Hp), lambda r, v: (r, 0)),
            pl.BlockSpec((Hp, TV), lambda r, v: (0, v)),
            pl.BlockSpec((1, TV), lambda r, v: (0, v)),
            pl.BlockSpec((TR, 1), lambda r, v: (r, 0)),
        ],
        out_specs=pl.BlockSpec((TR, 1), lambda r, v: (r, 0)),
        scratch_shapes=[
            pltpu.VMEM((TR, 1), f32),    # running max
            pltpu.VMEM((TR, 1), f32),    # running sum-exp
            pltpu.VMEM((TR, 1), f32),    # gold logit
        ],
        compiler_params=pltpu.CompilerParams(
            dimension_semantics=("parallel", "arbitrary"),
            vmem_limit_bytes=sc_vmem),
        cost_estimate=sc_cost,
    )(comb_flat, params["w_vocab_T"], params["b_vocab"], gold_flat)

    # final (tiny) reduction over time in glue
    return gold_logp[:ROWS, 0].reshape(T, B).sum(axis=0)             # (B,)


# ----------------------------------------------------------------------------------
# Parameter init (raw, module layout) + kernel-layout preparation (padded / transposed)
# ----------------------------------------------------------------------------------
def init_params(key, H, E, V):
    ks = jax.random.split(key, 8)
    return dict(
        W_att=jax.random.normal(ks[0], (H, 2 * H), jnp.float32) * 0.1,    # att_projection
        b_att=jax.random.normal(ks[1], (H,), jnp.float32) * 0.1,
        W_u=jax.random.normal(ks[2], (H, 3 * H), jnp.float32) * 0.1,      # combined_output_projection
        W_vocab=jax.random.normal(ks[3], (V, H), jnp.float32) * 0.1,      # target_vocab_projection
        b_vocab=jax.random.normal(ks[4], (V,), jnp.float32) * 0.1,
        W_ih=jax.random.normal(ks[5], (4 * H, H + E), jnp.float32) * 0.1, # LSTMCell, input = cat(o_prev, Y_t)
        W_hh=jax.random.normal(ks[6], (4 * H, H), jnp.float32) * 0.1,
        emb=jax.random.normal(ks[7], (V, E), jnp.float32) * 0.1,
    )


def prepare_params(raw, H, E, V, dtype=jnp.float32):
    """Build kernel-layout parameters.

    Feature dimensions are zero-padded to multiples of 128 so every Pallas block/store is
    lane-dense (exactness-preserving: padded lanes stay exactly zero).  `dtype=bfloat16`
    halves the weight DMA/VMEM of all MXU matmuls (accumulation stays f32); biases
    (b_att, b_vocab with its NEG_BIG pad-column trick) always stay f32.
    """
    Hp = _round_up(H, LANE)
    Ep = _round_up(E, LANE)
    TV = min(512, _round_up(V, LANE))        # vocab tile (lane dim of the score matmul)
    Vp = _round_up(V, TV)

    def gate_cols(w):                        # (rows, 4H) -> (rows, 4Hp), per-gate chunks
        out = jnp.zeros((w.shape[0], 4 * Hp), w.dtype)
        for k in range(4):
            out = out.at[:, k * Hp:k * Hp + H].set(w[:, k * H:(k + 1) * H])
        return out

    W_ih_T = raw["W_ih"].T                   # (H+E, 4H)
    w_ih_o_T = _pad2(gate_cols(W_ih_T[:H]), Hp, 4 * Hp)
    w_ih_y_T = _pad2(gate_cols(W_ih_T[H:]), Ep, 4 * Hp)
    w_hh_T = _pad2(gate_cols(raw["W_hh"].T), Hp, 4 * Hp)

    W_u_T = raw["W_u"].T                     # (3H, H)
    w_u_a_T = _pad2(W_u_T[:2 * H], 2 * Hp, Hp)
    w_u_h_T = _pad2(W_u_T[2 * H:], Hp, Hp)

    w_att_T = _pad2(raw["W_att"].T, 2 * Hp, Hp)
    b_att = _pad2(raw["b_att"].reshape(1, H), 1, Hp)

    w_vocab_T = _pad2(raw["W_vocab"].T, Hp, Vp)
    # pad vocab columns get a huge negative bias so they vanish from the logsumexp
    b_vocab = jnp.full((1, Vp), NEG_BIG, jnp.float32).at[0, :V].set(raw["b_vocab"])

    emb = _pad2(raw["emb"], V, Ep)

    cast = lambda w: w.astype(dtype)
    return dict(
        H=H, Hp=Hp, E=E, Ep=Ep, V=V, Vp=Vp, TV=TV,
        emb=cast(emb),
        w_att_T=cast(w_att_T), b_att=b_att.astype(jnp.float32),
        w_ih_o_T=cast(w_ih_o_T), w_ih_y_T=cast(w_ih_y_T), w_hh_T=cast(w_hh_T),
        w_u_a_T=cast(w_u_a_T), w_u_h_T=cast(w_u_h_T),
        w_vocab_T=cast(w_vocab_T), b_vocab=b_vocab,
    )


# ----------------------------------------------------------------------------------
# Pure-JAX reference (mirrors the PyTorch forward, eval mode)
# ----------------------------------------------------------------------------------
def reference_forward(raw, dec_init_state, vc, tgt, H):
    h, c = dec_init_state
    B = vc.shape[0]
    Y = raw["emb"][tgt[:-1]]                                         # (T, B, E)
    enc_proj = jnp.einsum("bsk,hk->bsh", vc, raw["W_att"]) + raw["b_att"]
    o_prev = jnp.zeros((B, H), jnp.float32)
    outs = []
    for t in range(Y.shape[0]):
        x = jnp.concatenate([o_prev, Y[t]], axis=1)
        gates = x @ raw["W_ih"].T + h @ raw["W_hh"].T
        i_g, f_g, g_g, o_g = jnp.split(gates, 4, axis=1)
        c = jax.nn.sigmoid(f_g) * c + jax.nn.sigmoid(i_g) * jnp.tanh(g_g)
        h = jax.nn.sigmoid(o_g) * jnp.tanh(c)
        e_t = jnp.einsum("bsh,bh->bs", enc_proj, h)
        alpha = jax.nn.softmax(e_t, axis=1)
        a_t = jnp.einsum("bs,bsk->bk", alpha, vc)
        u = jnp.concatenate([a_t, h], axis=1)
        o_t = jnp.tanh(u @ raw["W_u"].T)
        outs.append(o_t)
        o_prev = o_t
    comb = jnp.stack(outs)                                           # (T, B, H)
    P = jax.nn.log_softmax(comb @ raw["W_vocab"].T + raw["b_vocab"], axis=-1)
    gold_idx = tgt[1:]
    mask = (gold_idx != PAD_IDX).astype(jnp.float32)
    gold = jnp.take_along_axis(P, gold_idx[..., None], axis=-1)[..., 0] * mask
    return gold.sum(axis=0)


if __name__ == "__main__":
    # full-precision f32 matmuls in the XLA reference so the kernel check stays tight
    jax.config.update("jax_default_matmul_precision", "highest")

    B, H, E, S, V, TGT_LEN = 8, 32, 16, 8, 64, 9

    key = jax.random.PRNGKey(0)
    k_p, k_h, k_c, k_vc, k_tgt = jax.random.split(key, 5)

    raw = init_params(k_p, H, E, V)

    h0 = jax.random.normal(k_h, (B, H), jnp.float32) * 0.1
    c0 = jax.random.normal(k_c, (B, H), jnp.float32) * 0.1
    visual_context = jax.random.normal(k_vc, (B, S, 2 * H), jnp.float32) * 0.1
    target_padded = jax.random.randint(k_tgt, (TGT_LEN, B), 0, V, jnp.int32)
    # force some pad positions so the mask path is exercised
    target_padded = target_padded.at[-2:, : B // 2].set(PAD_IDX)

    ref = reference_forward(raw, (h0, c0), visual_context, target_padded, H)

    # f32 weights: tight numerical check (exact softmax reciprocal, f32 accumulation)
    params_f32 = prepare_params(raw, H, E, V, dtype=jnp.float32)
    scores = jax.block_until_ready(
        rnn_decoder_forward(params_f32, (h0, c0), visual_context, target_padded))
    assert scores.shape == (B,)
    assert jnp.allclose(scores, ref, atol=3e-3, rtol=3e-3), (scores, ref)

    # bf16 weight shipping (production config: halves weight HBM/VMEM streaming in the
    # decode + score kernels; accumulation and biases stay f32) -- loose sanity check.
    params_bf16 = prepare_params(raw, H, E, V, dtype=jnp.bfloat16)
    scores_bf = jax.block_until_ready(
        rnn_decoder_forward(params_bf16, (h0, c0), visual_context, target_padded))
    assert scores_bf.shape == (B,)
    assert bool(jnp.all(jnp.isfinite(scores_bf)))
    assert jnp.allclose(scores_bf, ref, atol=1.0, rtol=0.15), (scores_bf, ref)

    print("KERNEL_OK")
</pallas_src>

<mosaic_0001>
module attributes {stable_mosaic.version = 11 : i64} {
  func.func @att_proj_kernel(%arg0: i32, %arg1: memref<64x256xf32, #tpu.memory_space<vmem>>, %arg2: memref<256x128xf32, #tpu.memory_space<vmem>>, %arg3: memref<1x128xf32, #tpu.memory_space<vmem>>, %arg4: memref<64x128xf32, #tpu.memory_space<vmem>>) attributes {dimension_semantics = [#tpu.dimension_semantics<parallel>], iteration_bounds = array<i64: 1>, scalar_prefetch = 0 : i64, scratch_operands = 0 : i64, tpu.core_type = #tpu.core_type<tc>, window_params = [{transform_indices = @transform_0, window_bounds = array<i64: 64, 256>}, {pipeline_mode = #tpu.pipeline_mode<synchronous>, transform_indices = @transform_1, window_bounds = array<i64: 256, 128>}, {pipeline_mode = #tpu.pipeline_mode<synchronous>, transform_indices = @transform_2, window_bounds = array<i64: 1, 128>}, {transform_indices = @transform_3, window_bounds = array<i64: 64, 128>}]} {
    %c0 = arith.constant 0 : index
    %c0_0 = arith.constant 0 : index
    %0 = vector.load %arg1[%c0, %c0_0] : memref<64x256xf32, #tpu.memory_space<vmem>>, vector<64x256xf32>
    %c0_1 = arith.constant 0 : index
    %c0_2 = arith.constant 0 : index
    %1 = vector.load %arg2[%c0_1, %c0_2] : memref<256x128xf32, #tpu.memory_space<vmem>>, vector<256x128xf32>
    %cst = arith.constant dense<0.000000e+00> : vector<64x128xf32>
    %2 = tpu.matmul %0, %1, %cst {dimension_numbers = #tpu.dot_dimension_numbers<[1], [0], [0], [1], [0, 0, 1, 1], [], []>, precision = #tpu.contract_precision<fp32>} : vector<64x256xf32>, vector<256x128xf32>, vector<64x128xf32> -> vector<64x128xf32>
    %c0_3 = arith.constant 0 : index
    %c0_4 = arith.constant 0 : index
    %3 = vector.load %arg3[%c0_3, %c0_4] : memref<1x128xf32, #tpu.memory_space<vmem>>, vector<1x128xf32>
    %4 = vector.broadcast %3 : vector<1x128xf32> to vector<64x128xf32>
    %5 = arith.addf %2, %4 : vector<64x128xf32>
    %c0_5 = arith.constant 0 : index
    %c0_6 = arith.constant 0 : index
    %6 = vector.load %arg4[%c0_5, %c0_6] : memref<64x128xf32, #tpu.memory_space<vmem>>, vector<64x128xf32>
    tpu.vector_store %arg4[%c0_5, %c0_6], %5 {strides = array<i32>} : memref<64x128xf32, #tpu.memory_space<vmem>>, vector<64x128xf32>,
    return
  }
  func.func @transform_0(%arg0: i32) -> (i32, i32) {
    %c0_i32 = arith.constant 0 : i32
    %c0_i32_0 = arith.constant 0 : i32
    return %arg0, %c0_i32 : i32, i32
  }
  func.func @transform_1(%arg0: i32) -> (i32, i32) {
    %c0_i32 = arith.constant 0 : i32
    %c0_i32_0 = arith.constant 0 : i32
    %c0_i32_1 = arith.constant 0 : i32
    return %c0_i32, %c0_i32_0 : i32, i32
  }
  func.func @transform_2(%arg0: i32) -> (i32, i32) {
    %c0_i32 = arith.constant 0 : i32
    %c0_i32_0 = arith.constant 0 : i32
    %c0_i32_1 = arith.constant 0 : i32
    return %c0_i32, %c0_i32_0 : i32, i32
  }
  func.func @transform_3(%arg0: i32) -> (i32, i32) {
    %c0_i32 = arith.constant 0 : i32
    %c0_i32_0 = arith.constant 0 : i32
    return %arg0, %c0_i32 : i32, i32
  }
}

</mosaic_0001>

<llo_original>
// kernel: tpu_custom_call.1
$region0: #{tpu_custom_call.1}
  #allocation0 [shape = 'u32[]', space=smem, size = 0x4, offset = 0x4, fixed_abs, tag = 'smem constant byte address 0x4 - core index']
  #allocation1 [shape = 'u32[144,128]{1,0:T(1,128)}', space=vmem, size = 0x12000, scoped, tag = 'internal scratch']
  %s0 = inlined_call_operand.hbm [shape: f32[64,256], index: 0, kind: input, shape index: {}]
  %s1 = inlined_call_operand.hbm [shape: f32[256,128], index: 1, kind: input, shape index: {}]
  %s2 = inlined_call_operand.vmem [shape: f32[1,128], index: 2, kind: input, shape index: {}]
  %s3 = inlined_call_operand.hbm [shape: f32[64,128], index: 3, kind: output, shape index: {}]
  %s4 = sld [smem:[#allocation0]]
  $region30: #{tpu_custom_call.1} parent=0
    _
  %s6 = ssub.s32 1, %s4
  %s7 = scalar_select 0, %s6, %s4
  $region1: #{tpu_custom_call.1} parent=0
    #allocation2 [shape = 'u8[65536]{0}', space=vmem, size = 0x10000, scoped, tag = 'input window, operand 0, single buffered']
    #allocation3 [shape = 's32[1]{0}', space=sflag, size = 0x4, scoped, tag = 'scoped memory for tpu_custom_call.1']
    #allocation4 [shape = 's32[1]{0}', space=sflag, size = 0x4, scoped, tag = 'scoped memory for tpu_custom_call.1']
    #allocation5 [shape = 'u8[131072]{0}', space=vmem, size = 0x20000, scoped, tag = 'input window, operand 1, single buffered']
    #allocation6 [shape = 's32[1]{0}', space=sflag, size = 0x4, scoped, tag = 'scoped memory for tpu_custom_call.1']
    #allocation7 [shape = 'u8[32768]{0}', space=vmem, size = 0x8000, scoped, tag = 'output window, operand 0, single buffered']
    %8 = vsyncpa [#allocation3], 0
    %9 = vsyncpa [#allocation6], 0
    %10 = vsyncpa [#allocation4], 0
    // Predicated region
    $region2: #{tpu_custom_call.1} parent=1 // pred_check
      _
    $region3: #{tpu_custom_call.1} parent=1 // pred_check_branch
      %12 = sbr.rel (0) target = $region5
    $region4: #{tpu_custom_call.1} parent=1 // pred_region
      %s14 = ssub.s32 2048, 2048
      %15 = vsyncadd [#allocation3], %s14
      %s16 = sshll.u32 [#allocation2], 4
      %s17 = int_to_ptr.vmem [resolvable:$true] %s16
      %22 = dma.hbm_to_vmem [thread:$0]  %s0, 2048, %s17, [#allocation3], 256, 256, 16
    $region5: #{tpu_custom_call.1} parent=1 // pred_fallthru
      _
    // Predicated region
    $region6: #{tpu_custom_call.1} parent=1 // pred_check
      _
    $region7: #{tpu_custom_call.1} parent=1 // pred_check_branch
      %24 = sbr.rel (0) target = $region9
    $region8: #{tpu_custom_call.1} parent=1 // pred_region
      %s26 = ssub.s32 4096, 4096
      %27 = vsyncadd [#allocation6], %s26
      %s28 = sshll.u32 [#allocation5], 4
      %s29 = int_to_ptr.vmem [resolvable:$true] %s28
      %34 = dma.hbm_to_vmem [thread:$0]  %s1, 4096, %s29, [#allocation6], 128, 128, 8
    $region9: #{tpu_custom_call.1} parent=1 // pred_fallthru
      _
    // Predicated region
    $region10: #{tpu_custom_call.1} parent=1 // pred_check
      _
    $region11: #{tpu_custom_call.1} parent=1 // pred_check_branch
      %36 = sbr.rel (0) target = $region13
    $region12: #{tpu_custom_call.1} parent=1 // pred_region
      _
    $region13: #{tpu_custom_call.1} parent=1 // pred_fallthru
      _
    // Predicated region
    $region14: #{tpu_custom_call.1} parent=1 // pred_check
      _
    $region15: #{tpu_custom_call.1} parent=1 // pred_check_branch
      %38 = sbr.rel (0) target = $region17
    $region16: #{tpu_custom_call.1} parent=1 // pred_region
      %39 = dma.done [#allocation3], 2048
    $region17: #{tpu_custom_call.1} parent=1 // pred_fallthru
      _
    // Predicated region
    $region18: #{tpu_custom_call.1} parent=1 // pred_check
      _
    $region19: #{tpu_custom_call.1} parent=1 // pred_check_branch
      %41 = sbr.rel (0) target = $region21
    $region20: #{tpu_custom_call.1} parent=1 // pred_region
      %42 = dma.done [#allocation6], 4096
    $region21: #{tpu_custom_call.1} parent=1 // pred_fallthru
      _
    %v43 = vld [vmem:[#allocation2] sm:$0xff]
    %v44 = vld [vmem:[#allocation2 + $0x8] sm:$0xff]
    %v45 = vld [vmem:[#allocation2 + $0x10] sm:$0xff]
    %v46 = vld [vmem:[#allocation2 + $0x18] sm:$0xff]
    %v47 = vld [vmem:[#allocation2 + $0x20] sm:$0xff]
    %v48 = vld [vmem:[#allocation2 + $0x28] sm:$0xff]
    %v49 = vld [vmem:[#allocation2 + $0x30] sm:$0xff]
    %v50 = vld [vmem:[#allocation2 + $0x38] sm:$0xff]
    %v51 = vld [vmem:[#allocation2 + $0x40] sm:$0xff]
    %v52 = vld [vmem:[#allocation2 + $0x48] sm:$0xff]
    %v53 = vld [vmem:[#allocation2 + $0x50] sm:$0xff]
    %v54 = vld [vmem:[#allocation2 + $0x58] sm:$0xff]
    %v55 = vld [vmem:[#allocation2 + $0x60] sm:$0xff]
    %v56 = vld [vmem:[#allocation2 + $0x68] sm:$0xff]
    %v57 = vld [vmem:[#allocation2 + $0x70] sm:$0xff]
    %v58 = vld [vmem:[#allocation2 + $0x78] sm:$0xff]
    %v59 = vld [vmem:[#allocation5] sm:$0xff]
    %v60 = vld [vmem:[#allocation5 + $0x8] sm:$0xff]
    %v61 = vld [vmem:[#allocation5 + $0x10] sm:$0xff]
    %v62 = vld [vmem:[#allocation5 + $0x18] sm:$0xff]
    %v63 = vld [vmem:[#allocation5 + $0x20] sm:$0xff]
    %v64 = vld [vmem:[#allocation5 + $0x28] sm:$0xff]
    %v65 = vld [vmem:[#allocation5 + $0x30] sm:$0xff]
    %v66 = vld [vmem:[#allocation5 + $0x38] sm:$0xff]
    %v67 = vld [vmem:[#allocation5 + $0x40] sm:$0xff]
    %v68 = vld [vmem:[#allocation5 + $0x48] sm:$0xff]
    %v69 = vld [vmem:[#allocation5 + $0x50] sm:$0xff]
    %v70 = vld [vmem:[#allocation5 + $0x58] sm:$0xff]
    %v71 = vld [vmem:[#allocation5 + $0x60] sm:$0xff]
    %v72 = vld [vmem:[#allocation5 + $0x68] sm:$0xff]
    %v73 = vld [vmem:[#allocation5 + $0x70] sm:$0xff]
    %v74 = vld [vmem:[#allocation5 + $0x78] sm:$0xff]
    %v75 = vld [vmem:[#allocation5 + $0x80] sm:$0xff]
    %v76 = vld [vmem:[#allocation5 + $0x88] sm:$0xff]
    %v77 = vld [vmem:[#allocation5 + $0x90] sm:$0xff]
    %v78 = vld [vmem:[#allocation5 + $0x98] sm:$0xff]
    %v79 = vld [vmem:[#allocation5 + $0xa0] sm:$0xff]
    %v80 = vld [vmem:[#allocation5 + $0xa8] sm:$0xff]
    %v81 = vld [vmem:[#allocation5 + $0xb0] sm:$0xff]
    %v82 = vld [vmem:[#allocation5 + $0xb8] sm:$0xff]
    %v83 = vld [vmem:[#allocation5 + $0xc0] sm:$0xff]
    %v84 = vld [vmem:[#allocation5 + $0xc8] sm:$0xff]
    %v85 = vld [vmem:[#allocation5 + $0xd0] sm:$0xff]
    %v86 = vld [vmem:[#allocation5 + $0xd8] sm:$0xff]
    %v87 = vld [vmem:[#allocation5 + $0xe0] sm:$0xff]
    %v88 = vld [vmem:[#allocation5 + $0xe8] sm:$0xff]
    %v89 = vld [vmem:[#allocation5 + $0xf0] sm:$0xff]
    %v90 = vld [vmem:[#allocation5 + $0xf8] sm:$0xff]
    %v91 = vld [vmem:[%s2] sm:$0x1]
    %v93 = vlaneseq
    %v94 = vshrl.u32 %v93, 7
    %v95 = vsub.s32 0, %v94
    %v96 = vrot.slane %v91, %v95
    %98 = vmatprep.subr.mxu0 0.0
    %v99 = vand.u32 %v74, 4294901760
    %100 = vmatpush1.msra.mxu0 %v99
    %101 = vmatprep.subr.mxu0 0.0
    %v102 = vand.u32 %v73, 4294901760
    %103 = vmatpush1.msra.mxu0 %v102
    %104 = vmatprep.subr.mxu0 0.0
    %v105 = vand.u32 %v72, 4294901760
    %106 = vmatpush1.msra.mxu0 %v105
    %107 = vmatprep.subr.mxu0 0.0
    %v108 = vand.u32 %v71, 4294901760
    %109 = vmatpush1.msra.mxu0 %v108
    %110 = vmatprep.subr.mxu0 0.0
    %v111 = vand.u32 %v70, 4294901760
    %112 = vmatpush1.msra.mxu0 %v111
    %113 = vmatprep.subr.mxu0 0.0
    %v114 = vand.u32 %v69, 4294901760
    %115 = vmatpush1.msra.mxu0 %v114
    %116 = vmatprep.subr.mxu0 0.0
    %v117 = vand.u32 %v68, 4294901760
    %118 = vmatpush1.msra.mxu0 %v117
    %119 = vmatprep.subr.mxu0 0.0
    %v120 = vand.u32 %v67, 4294901760
    %121 = vmatpush1.msra.mxu0 %v120
    %122 = vmatprep.subr.mxu0 0.0
    %v123 = vand.u32 %v66, 4294901760
    %124 = vmatpush1.msra.mxu0 %v123
    %125 = vmatprep.subr.mxu0 0.0
    %v126 = vand.u32 %v65, 4294901760
    %127 = vmatpush1.msra.mxu0 %v126
    %128 = vmatprep.subr.mxu0 0.0
    %v129 = vand.u32 %v64, 4294901760
    %130 = vmatpush1.msra.mxu0 %v129
    %131 = vmatprep.subr.mxu0 0.0
    %v132 = vand.u32 %v63, 4294901760
    %133 = vmatpush1.msra.mxu0 %v132
    %134 = vmatprep.subr.mxu0 0.0
    %v135 = vand.u32 %v62, 4294901760
    %136 = vmatpush1.msra.mxu0 %v135
    %137 = vmatprep.subr.mxu0 0.0
    %v138 = vand.u32 %v61, 4294901760
    %139 = vmatpush1.msra.mxu0 %v138
    %140 = vmatprep.subr.mxu0 0.0
    %v141 = vand.u32 %v60, 4294901760
    %142 = vmatpush1.msra.mxu0 %v141
    %143 = vmatprep.subr.mxu0 0.0
    %v144 = vand.u32 %v59, 4294901760
    %145 = vmatpush1.msra.mxu0 %v144
    %146 = vmatprep.subr.mxu0 0.0
    %v147 = vand.u32 %v90, 4294901760
    %148 = vmatpush2.msra.mxu0 %v147
    %149 = vmatprep.subr.mxu0 0.0
    %v150 = vand.u32 %v89, 4294901760
    %151 = vmatpush2.msra.mxu0 %v150
    %152 = vmatprep.subr.mxu0 0.0
    %v153 = vand.u32 %v88, 4294901760
    %154 = vmatpush2.msra.mxu0 %v153
    %155 = vmatprep.subr.mxu0 0.0
    %v156 = vand.u32 %v87, 4294901760
    %157 = vmatpush2.msra.mxu0 %v156
    %158 = vmatprep.subr.mxu0 0.0
    %v159 = vand.u32 %v86, 4294901760
    %160 = vmatpush2.msra.mxu0 %v159
    %161 = vmatprep.subr.mxu0 0.0
    %v162 = vand.u32 %v85, 4294901760
    %163 = vmatpush2.msra.mxu0 %v162
    %164 = vmatprep.subr.mxu0 0.0
    %v165 = vand.u32 %v84, 4294901760
    %166 = vmatpush2.msra.mxu0 %v165
    %167 = vmatprep.subr.mxu0 0.0
    %v168 = vand.u32 %v83, 4294901760
    %169 = vmatpush2.msra.mxu0 %v168
    %170 = vmatprep.subr.mxu0 0.0
    %v171 = vand.u32 %v82, 4294901760
    %172 = vmatpush2.msra.mxu0 %v171
    %173 = vmatprep.subr.mxu0 0.0
    %v174 = vand.u32 %v81, 4294901760
    %175 = vmatpush2.msra.mxu0 %v174
    %176 = vmatprep.subr.mxu0 0.0
    %v177 = vand.u32 %v80, 4294901760
    %178 = vmatpush2.msra.mxu0 %v177
    %179 = vmatprep.subr.mxu0 0.0
    %v180 = vand.u32 %v79, 4294901760
    %181 = vmatpush2.msra.mxu0 %v180
    %182 = vmatprep.subr.mxu0 0.0
    %v183 = vand.u32 %v78, 4294901760
    %184 = vmatpush2.msra.mxu0 %v183
    %185 = vmatprep.subr.mxu0 0.0
    %v186 = vand.u32 %v77, 4294901760
    %187 = vmatpush2.msra.mxu0 %v186
    %188 = vmatprep.subr.mxu0 0.0
    %v189 = vand.u32 %v76, 4294901760
    %190 = vmatpush2.msra.mxu0 %v189
    %191 = vmatprep.subr.mxu0 0.0
    %v192 = vand.u32 %v75, 4294901760
    %193 = vmatpush2.msra.mxu0 %v192
    %v194 = vand.u32 %v44, 4294901760
    %v195 = vsub.f32 %v44, %v194
    %v196 = vand.u32 %v195, 4294901760
    %v197 = vsub.f32 %v195, %v196
    %v198 = vand.u32 %v197, 4294901760
    %199 = vmatprep.mubr.f32.mxu0 %v198
    %v200 = vand.u32 %v43, 4294901760
    %v201 = vsub.f32 %v43, %v200
    %v202 = vand.u32 %v201, 4294901760
    %v203 = vsub.f32 %v201, %v202
    %v204 = vand.u32 %v203, 4294901760
    %205 = vmatmul.mubr.f32.gmra.mxu0 %v204
    %v206 = vpop.f32.mrf.mxu0
    %v207 = vadd.f32 %v96, %v206
    %v208 = vpop.f32.mrf.mxu0
    %v209 = vand.u32 %v46, 4294901760
    %v210 = vsub.f32 %v46, %v209
    %v211 = vand.u32 %v210, 4294901760
    %v212 = vsub.f32 %v210, %v211
    %v213 = vand.u32 %v212, 4294901760
    %214 = vmatprep.mubr.f32.mxu0 %v213
    %v215 = vand.u32 %v45, 4294901760
    %v216 = vsub.f32 %v45, %v215
    %v217 = vand.u32 %v216, 4294901760
    %v218 = vsub.f32 %v216, %v217
    %v219 = vand.u32 %v218, 4294901760
    %220 = vmatmul.mubr.f32.gmra.mxu0 %v219
    %v221 = vpop.f32.mrf.mxu0
    %v222 = vadd.f32 %v96, %v221
    %v223 = vpop.f32.mrf.mxu0
    %v224 = vand.u32 %v48, 4294901760
    %v225 = vsub.f32 %v48, %v224
    %v226 = vand.u32 %v225, 4294901760
    %v227 = vsub.f32 %v225, %v226
    %v228 = vand.u32 %v227, 4294901760
    %229 = vmatprep.mubr.f32.mxu0 %v228
    %v230 = vand.u32 %v47, 4294901760
    %v231 = vsub.f32 %v47, %v230
    %v232 = vand.u32 %v231, 4294901760
    %v233 = vsub.f32 %v231, %v232
    %v234 = vand.u32 %v233, 4294901760
    %235 = vmatmul.mubr.f32.gmra.mxu0 %v234
    %v236 = vpop.f32.mrf.mxu0
    %v237 = vadd.f32 %v96, %v236
    %v238 = vpop.f32.mrf.mxu0
    %v239 = vand.u32 %v50, 4294901760
    %v240 = vsub.f32 %v50, %v239
    %v241 = vand.u32 %v240, 4294901760
    %v242 = vsub.f32 %v240, %v241
    %v243 = vand.u32 %v242, 4294901760
    %244 = vmatprep.mubr.f32.mxu0 %v243
    %v245 = vand.u32 %v49, 4294901760
    %v246 = vsub.f32 %v49, %v245
    %v247 = vand.u32 %v246, 4294901760
    %v248 = vsub.f32 %v246, %v247
    %v249 = vand.u32 %v248, 4294901760
    %250 = vmatmul.mubr.f32.gmra.mxu0 %v249
    %v251 = vpop.f32.mrf.mxu0
    %v252 = vadd.f32 %v96, %v251
    %v253 = vpop.f32.mrf.mxu0
    %v254 = vand.u32 %v52, 4294901760
    %v255 = vsub.f32 %v52, %v254
    %v256 = vand.u32 %v255, 4294901760
    %v257 = vsub.f32 %v255, %v256
    %v258 = vand.u32 %v257, 4294901760
    %259 = vmatprep.mubr.f32.mxu0 %v258
    %v260 = vand.u32 %v51, 4294901760
    %v261 = vsub.f32 %v51, %v260
    %v262 = vand.u32 %v261, 4294901760
    %v263 = vsub.f32 %v261, %v262
    %v264 = vand.u32 %v263, 4294901760
    %265 = vmatmul.mubr.f32.gmra.mxu0 %v264
    %v266 = vpop.f32.mrf.mxu0
    %v267 = vadd.f32 %v96, %v266
    %v268 = vpop.f32.mrf.mxu0
    %v269 = vand.u32 %v54, 4294901760
    %v270 = vsub.f32 %v54, %v269
    %v271 = vand.u32 %v270, 4294901760
    %v272 = vsub.f32 %v270, %v271
    %v273 = vand.u32 %v272, 4294901760
    %274 = vmatprep.mubr.f32.mxu0 %v273
    %v275 = vand.u32 %v53, 4294901760
    %v276 = vsub.f32 %v53, %v275
    %v277 = vand.u32 %v276, 4294901760
    %v278 = vsub.f32 %v276, %v277
    %v279 = vand.u32 %v278, 4294901760
    %280 = vmatmul.mubr.f32.gmra.mxu0 %v279
    %v281 = vpop.f32.mrf.mxu0
    %v282 = vadd.f32 %v96, %v281
    %v283 = vpop.f32.mrf.mxu0
    %v284 = vand.u32 %v56, 4294901760
    %v285 = vsub.f32 %v56, %v284
    %v286 = vand.u32 %v285, 4294901760
    %v287 = vsub.f32 %v285, %v286
    %v288 = vand.u32 %v287, 4294901760
    %289 = vmatprep.mubr.f32.mxu0 %v288
    %v290 = vand.u32 %v55, 4294901760
    %v291 = vsub.f32 %v55, %v290
    %v292 = vand.u32 %v291, 4294901760
    %v293 = vsub.f32 %v291, %v292
    %v294 = vand.u32 %v293, 4294901760
    %295 = vmatmul.mubr.f32.gmra.mxu0 %v294
    %v296 = vpop.f32.mrf.mxu0
    %v297 = vadd.f32 %v96, %v296
    %v298 = vpop.f32.mrf.mxu0
    %v299 = vand.u32 %v58, 4294901760
    %v300 = vsub.f32 %v58, %v299
    %v301 = vand.u32 %v300, 4294901760
    %v302 = vsub.f32 %v300, %v301
    %v303 = vand.u32 %v302, 4294901760
    %304 = vmatprep.mubr.f32.mxu0 %v303
    %v305 = vand.u32 %v57, 4294901760
    %v306 = vsub.f32 %v57, %v305
    %v307 = vand.u32 %v306, 4294901760
    %v308 = vsub.f32 %v306, %v307
    %v309 = vand.u32 %v308, 4294901760
    %310 = vmatmul.mubr.f32.gmra.mxu0 %v309
    %v311 = vpop.f32.mrf.mxu0
    %v312 = vadd.f32 %v96, %v311
    %v313 = vpop.f32.mrf.mxu0
    %314 = vdwg.mxu0
    %315 = vmatprep.subr.mxu0 0.0
    %v316 = vand.u32 %v74, 4294901760
    %v317 = vsub.f32 %v74, %v316
    %v318 = vand.u32 %v317, 4294901760
    %v319 = vsub.f32 %v317, %v318
    %v320 = vand.u32 %v319, 4294901760
    %321 = vmatpush1.msra.mxu0 %v320
    %322 = vmatprep.subr.mxu0 0.0
    %v323 = vand.u32 %v73, 4294901760
    %v324 = vsub.f32 %v73, %v323
    %v325 = vand.u32 %v324, 4294901760
    %v326 = vsub.f32 %v324, %v325
    %v327 = vand.u32 %v326, 4294901760
    %328 = vmatpush1.msra.mxu0 %v327
    %329 = vmatprep.subr.mxu0 0.0
    %v330 = vand.u32 %v72, 4294901760
    %v331 = vsub.f32 %v72, %v330
    %v332 = vand.u32 %v331, 4294901760
    %v333 = vsub.f32 %v331, %v332
    %v334 = vand.u32 %v333, 4294901760
    %335 = vmatpush1.msra.mxu0 %v334
    %336 = vmatprep.subr.mxu0 0.0
    %v337 = vand.u32 %v71, 4294901760
    %v338 = vsub.f32 %v71, %v337
    %v339 = vand.u32 %v338, 4294901760
    %v340 = vsub.f32 %v338, %v339
    %v341 = vand.u32 %v340, 4294901760
    %342 = vmatpush1.msra.mxu0 %v341
    %343 = vmatprep.subr.mxu0 0.0
    %v344 = vand.u32 %v70, 4294901760
    %v345 = vsub.f32 %v70, %v344
    %v346 = vand.u32 %v345, 4294901760
    %v347 = vsub.f32 %v345, %v346
    %v348 = vand.u32 %v347, 4294901760
    %349 = vmatpush1.msra.mxu0 %v348
    %350 = vmatprep.subr.mxu0 0.0
    %v351 = vand.u32 %v69, 4294901760
    %v352 = vsub.f32 %v69, %v351
    %v353 = vand.u32 %v352, 4294901760
    %v354 = vsub.f32 %v352, %v353
    %v355 = vand.u32 %v354, 4294901760
    %356 = vmatpush1.msra.mxu0 %v355
    %357 = vmatprep.subr.mxu0 0.0
    %v358 = vand.u32 %v68, 4294901760
    %v359 = vsub.f32 %v68, %v358
    %v360 = vand.u32 %v359, 4294901760
    %v361 = vsub.f32 %v359, %v360
    %v362 = vand.u32 %v361, 4294901760
    %363 = vmatpush1.msra.mxu0 %v362
    %364 = vmatprep.subr.mxu0 0.0
    %v365 = vand.u32 %v67, 4294901760
    %v366 = vsub.f32 %v67, %v365
    %v367 = vand.u32 %v366, 4294901760
    %v368 = vsub.f32 %v366, %v367
    %v369 = vand.u32 %v368, 4294901760
    %370 = vmatpush1.msra.mxu0 %v369
    %371 = vmatprep.subr.mxu0 0.0
    %v372 = vand.u32 %v66, 4294901760
    %v373 = vsub.f32 %v66, %v372
    %v374 = vand.u32 %v373, 4294901760
    %v375 = vsub.f32 %v373, %v374
    %v376 = vand.u32 %v375, 4294901760
    %377 = vmatpush1.msra.mxu0 %v376
    %378 = vmatprep.subr.mxu0 0.0
    %v379 = vand.u32 %v65, 4294901760
    %v380 = vsub.f32 %v65, %v379
    %v381 = vand.u32 %v380, 4294901760
    %v382 = vsub.f32 %v380, %v381
    %v383 = vand.u32 %v382, 4294901760
    %384 = vmatpush1.msra.mxu0 %v383
    %385 = vmatprep.subr.mxu0 0.0
    %v386 = vand.u32 %v64, 4294901760
    %v387 = vsub.f32 %v64, %v386
    %v388 = vand.u32 %v387, 4294901760
    %v389 = vsub.f32 %v387, %v388
    %v390 = vand.u32 %v389, 4294901760
    %391 = vmatpush1.msra.mxu0 %v390
    %392 = vmatprep.subr.mxu0 0.0
    %v393 = vand.u32 %v63, 4294901760
    %v394 = vsub.f32 %v63, %v393
    %v395 = vand.u32 %v394, 4294901760
    %v396 = vsub.f32 %v394, %v395
    %v397 = vand.u32 %v396, 4294901760
    %398 = vmatpush1.msra.mxu0 %v397
    %399 = vmatprep.subr.mxu0 0.0
    %v400 = vand.u32 %v62, 4294901760
    %v401 = vsub.f32 %v62, %v400
    %v402 = vand.u32 %v401, 4294901760
    %v403 = vsub.f32 %v401, %v402
    %v404 = vand.u32 %v403, 4294901760
    %405 = vmatpush1.msra.mxu0 %v404
    %406 = vmatprep.subr.mxu0 0.0
    %v407 = vand.u32 %v61, 4294901760
    %v408 = vsub.f32 %v61, %v407
    %v409 = vand.u32 %v408, 4294901760
    %v410 = vsub.f32 %v408, %v409
    %v411 = vand.u32 %v410, 4294901760
    %412 = vmatpush1.msra.mxu0 %v411
    %413 = vmatprep.subr.mxu0 0.0
    %v414 = vand.u32 %v60, 4294901760
    %v415 = vsub.f32 %v60, %v414
    %v416 = vand.u32 %v415, 4294901760
    %v417 = vsub.f32 %v415, %v416
    %v418 = vand.u32 %v417, 4294901760
    %419 = vmatpush1.msra.mxu0 %v418
    %420 = vmatprep.subr.mxu0 0.0
    %v421 = vand.u32 %v59, 4294901760
    %v422 = vsub.f32 %v59, %v421
    %v423 = vand.u32 %v422, 4294901760
    %v424 = vsub.f32 %v422, %v423
    %v425 = vand.u32 %v424, 4294901760
    %426 = vmatpush1.msra.mxu0 %v425
    %427 = vmatprep.subr.mxu0 0.0
    %v428 = vand.u32 %v90, 4294901760
    %v429 = vsub.f32 %v90, %v428
    %v430 = vand.u32 %v429, 4294901760
    %v431 = vsub.f32 %v429, %v430
    %v432 = vand.u32 %v431, 4294901760
    %433 = vmatpush2.msra.mxu0 %v432
    %434 = vmatprep.subr.mxu0 0.0
    %v435 = vand.u32 %v89, 4294901760
    %v436 = vsub.f32 %v89, %v435
    %v437 = vand.u32 %v436, 4294901760
    %v438 = vsub.f32 %v436, %v437
    %v439 = vand.u32 %v438, 4294901760
    %440 = vmatpush2.msra.mxu0 %v439
    %441 = vmatprep.subr.mxu0 0.0
    %v442 = vand.u32 %v88, 4294901760
    %v443 = vsub.f32 %v88, %v442
    %v444 = vand.u32 %v443, 4294901760
    %v445 = vsub.f32 %v443, %v444
    %v446 = vand.u32 %v445, 4294901760
    %447 = vmatpush2.msra.mxu0 %v446
    %448 = vmatprep.subr.mxu0 0.0
    %v449 = vand.u32 %v87, 4294901760
    %v450 = vsub.f32 %v87, %v449
    %v451 = vand.u32 %v450, 4294901760
    %v452 = vsub.f32 %v450, %v451
    %v453 = vand.u32 %v452, 4294901760
    %454 = vmatpush2.msra.mxu0 %v453
    %455 = vmatprep.subr.mxu0 0.0
    %v456 = vand.u32 %v86, 4294901760
    %v457 = vsub.f32 %v86, %v456
    %v458 = vand.u32 %v457, 4294901760
    %v459 = vsub.f32 %v457, %v458
    %v460 = vand.u32 %v459, 4294901760
    %461 = vmatpush2.msra.mxu0 %v460
    %462 = vmatprep.subr.mxu0 0.0
    %v463 = vand.u32 %v85, 4294901760
    %v464 = vsub.f32 %v85, %v463
    %v465 = vand.u32 %v464, 4294901760
    %v466 = vsub.f32 %v464, %v465
    %v467 = vand.u32 %v466, 4294901760
    %468 = vmatpush2.msra.mxu0 %v467
    %469 = vmatprep.subr.mxu0 0.0
    %v470 = vand.u32 %v84, 4294901760
    %v471 = vsub.f32 %v84, %v470
    %v472 = vand.u32 %v471, 4294901760
    %v473 = vsub.f32 %v471, %v472
    %v474 = vand.u32 %v473, 4294901760
    %475 = vmatpush2.msra.mxu0 %v474
    %476 = vmatprep.subr.mxu0 0.0
    %v477 = vand.u32 %v83, 4294901760
    %v478 = vsub.f32 %v83, %v477
    %v479 = vand.u32 %v478, 4294901760
    %v480 = vsub.f32 %v478, %v479
    %v481 = vand.u32 %v480, 4294901760
    %482 = vmatpush2.msra.mxu0 %v481
    %483 = vmatprep.subr.mxu0 0.0
    %v484 = vand.u32 %v82, 4294901760
    %v485 = vsub.f32 %v82, %v484
    %v486 = vand.u32 %v485, 4294901760
    %v487 = vsub.f32 %v485, %v486
    %v488 = vand.u32 %v487, 4294901760
    %489 = vmatpush2.msra.mxu0 %v488
    %490 = vmatprep.subr.mxu0 0.0
    %v491 = vand.u32 %v81, 4294901760
    %v492 = vsub.f32 %v81, %v491
    %v493 = vand.u32 %v492, 4294901760
    %v494 = vsub.f32 %v492, %v493
    %v495 = vand.u32 %v494, 4294901760
    %496 = vmatpush2.msra.mxu0 %v495
    %497 = vmatprep.subr.mxu0 0.0
    %v498 = vand.u32 %v80, 4294901760
    %v499 = vsub.f32 %v80, %v498
    %v500 = vand.u32 %v499, 4294901760
    %v501 = vsub.f32 %v499, %v500
    %v502 = vand.u32 %v501, 4294901760
    %503 = vmatpush2.msra.mxu0 %v502
    %504 = vmatprep.subr.mxu0 0.0
    %v505 = vand.u32 %v79, 4294901760
    %v506 = vsub.f32 %v79, %v505
    %v507 = vand.u32 %v506, 4294901760
    %v508 = vsub.f32 %v506, %v507
    %v509 = vand.u32 %v508, 4294901760
    %510 = vmatpush2.msra.mxu0 %v509
    %511 = vmatprep.subr.mxu0 0.0
    %v512 = vand.u32 %v78, 4294901760
    %v513 = vsub.f32 %v78, %v512
    %v514 = vand.u32 %v513, 4294901760
    %v515 = vsub.f32 %v513, %v514
    %v516 = vand.u32 %v515, 4294901760
    %517 = vmatpush2.msra.mxu0 %v516
    %518 = vmatprep.subr.mxu0 0.0
    %v519 = vand.u32 %v77, 4294901760
    %v520 = vsub.f32 %v77, %v519
    %v521 = vand.u32 %v520, 4294901760
    %v522 = vsub.f32 %v520, %v521
    %v523 = vand.u32 %v522, 4294901760
    %524 = vmatpush2.msra.mxu0 %v523
    %525 = vmatprep.subr.mxu0 0.0
    %v526 = vand.u32 %v76, 4294901760
    %v527 = vsub.f32 %v76, %v526
    %v528 = vand.u32 %v527, 4294901760
    %v529 = vsub.f32 %v527, %v528
    %v530 = vand.u32 %v529, 4294901760
    %531 = vmatpush2.msra.mxu0 %v530
    %532 = vmatprep.subr.mxu0 0.0
    %v533 = vand.u32 %v75, 4294901760
    %v534 = vsub.f32 %v75, %v533
    %v535 = vand.u32 %v534, 4294901760
    %v536 = vsub.f32 %v534, %v535
    %v537 = vand.u32 %v536, 4294901760
    %538 = vmatpush2.msra.mxu0 %v537
    %v539 = vand.u32 %v44, 4294901760
    %540 = vmatprep.mubr.f32.mxu0 %v539
    %v541 = vand.u32 %v43, 4294901760
    %542 = vmatmul.mubr.f32.gmra.mxu0 %v541
    %v543 = vpop.f32.mrf.mxu0
    %v544 = vadd.f32 %v207, %v543
    %v545 = vpop.f32.mrf.mxu0
    %v546 = vand.u32 %v46, 4294901760
    %547 = vmatprep.mubr.f32.mxu0 %v546
    %v548 = vand.u32 %v45, 4294901760
    %549 = vmatmul.mubr.f32.gmra.mxu0 %v548
    %v550 = vpop.f32.mrf.mxu0
    %v551 = vadd.f32 %v222, %v550
    %v552 = vpop.f32.mrf.mxu0
    %v553 = vand.u32 %v48, 4294901760
    %554 = vmatprep.mubr.f32.mxu0 %v553
    %v555 = vand.u32 %v47, 4294901760
    %556 = vmatmul.mubr.f32.gmra.mxu0 %v555
    %v557 = vpop.f32.mrf.mxu0
    %v558 = vadd.f32 %v237, %v557
    %v559 = vpop.f32.mrf.mxu0
    %v560 = vand.u32 %v50, 4294901760
    %561 = vmatprep.mubr.f32.mxu0 %v560
    %v562 = vand.u32 %v49, 4294901760
    %563 = vmatmul.mubr.f32.gmra.mxu0 %v562
    %v564 = vpop.f32.mrf.mxu0
    %v565 = vadd.f32 %v252, %v564
    %v566 = vpop.f32.mrf.mxu0
    %v567 = vand.u32 %v52, 4294901760
    %568 = vmatprep.mubr.f32.mxu0 %v567
    %v569 = vand.u32 %v51, 4294901760
    %570 = vmatmul.mubr.f32.gmra.mxu0 %v569
    %v571 = vpop.f32.mrf.mxu0
    %v572 = vadd.f32 %v267, %v571
    %v573 = vpop.f32.mrf.mxu0
    %v574 = vand.u32 %v54, 4294901760
    %575 = vmatprep.mubr.f32.mxu0 %v574
    %v576 = vand.u32 %v53, 4294901760
    %577 = vmatmul.mubr.f32.gmra.mxu0 %v576
    %v578 = vpop.f32.mrf.mxu0
    %v579 = vadd.f32 %v282, %v578
    %v580 = vpop.f32.mrf.mxu0
    %v581 = vand.u32 %v56, 4294901760
    %582 = vmatprep.mubr.f32.mxu0 %v581
    %v583 = vand.u32 %v55, 4294901760
    %584 = vmatmul.mubr.f32.gmra.mxu0 %v583
    %v585 = vpop.f32.mrf.mxu0
    %v586 = vadd.f32 %v297, %v585
    %v587 = vpop.f32.mrf.mxu0
    %v588 = vand.u32 %v58, 4294901760
    %589 = vmatprep.mubr.f32.mxu0 %v588
    %v590 = vand.u32 %v57, 4294901760
    %591 = vmatmul.mubr.f32.gmra.mxu0 %v590
    %v592 = vpop.f32.mrf.mxu0
    %v593 = vadd.f32 %v312, %v592
    %v594 = vpop.f32.mrf.mxu0
    %595 = vdwg.mxu0
    %596 = vmatprep.subr.mxu0 0.0
    %v597 = vand.u32 %v74, 4294901760
    %v598 = vsub.f32 %v74, %v597
    %599 = vmatpush1.msra.mxu0 %v598
    %600 = vmatprep.subr.mxu0 0.0
    %v601 = vand.u32 %v73, 4294901760
    %v602 = vsub.f32 %v73, %v601
    %603 = vmatpush1.msra.mxu0 %v602
    %604 = vmatprep.subr.mxu0 0.0
    %v605 = vand.u32 %v72, 4294901760
    %v606 = vsub.f32 %v72, %v605
    %607 = vmatpush1.msra.mxu0 %v606
    %608 = vmatprep.subr.mxu0 0.0
    %v609 = vand.u32 %v71, 4294901760
    %v610 = vsub.f32 %v71, %v609
    %611 = vmatpush1.msra.mxu0 %v610
    %612 = vmatprep.subr.mxu0 0.0
    %v613 = vand.u32 %v70, 4294901760
    %v614 = vsub.f32 %v70, %v613
    %615 = vmatpush1.msra.mxu0 %v614
    %616 = vmatprep.subr.mxu0 0.0
    %v617 = vand.u32 %v69, 4294901760
    %v618 = vsub.f32 %v69, %v617
    %619 = vmatpush1.msra.mxu0 %v618
    %620 = vmatprep.subr.mxu0 0.0
    %v621 = vand.u32 %v68, 4294901760
    %v622 = vsub.f32 %v68, %v621
    %623 = vmatpush1.msra.mxu0 %v622
    %624 = vmatprep.subr.mxu0 0.0
    %v625 = vand.u32 %v67, 4294901760
    %v626 = vsub.f32 %v67, %v625
    %627 = vmatpush1.msra.mxu0 %v626
    %628 = vmatprep.subr.mxu0 0.0
    %v629 = vand.u32 %v66, 4294901760
    %v630 = vsub.f32 %v66, %v629
    %631 = vmatpush1.msra.mxu0 %v630
    %632 = vmatprep.subr.mxu0 0.0
    %v633 = vand.u32 %v65, 4294901760
    %v634 = vsub.f32 %v65, %v633
    %635 = vmatpush1.msra.mxu0 %v634
    %636 = vmatprep.subr.mxu0 0.0
    %v637 = vand.u32 %v64, 4294901760
    %v638 = vsub.f32 %v64, %v637
    %639 = vmatpush1.msra.mxu0 %v638
    %640 = vmatprep.subr.mxu0 0.0
    %v641 = vand.u32 %v63, 4294901760
    %v642 = vsub.f32 %v63, %v641
    %643 = vmatpush1.msra.mxu0 %v642
    %644 = vmatprep.subr.mxu0 0.0
    %v645 = vand.u32 %v62, 4294901760
    %v646 = vsub.f32 %v62, %v645
    %647 = vmatpush1.msra.mxu0 %v646
    %648 = vmatprep.subr.mxu0 0.0
    %v649 = vand.u32 %v61, 4294901760
    %v650 = vsub.f32 %v61, %v649
    %651 = vmatpush1.msra.mxu0 %v650
    %652 = vmatprep.subr.mxu0 0.0
    %v653 = vand.u32 %v60, 4294901760
    %v654 = vsub.f32 %v60, %v653
    %655 = vmatpush1.msra.mxu0 %v654
    %656 = vmatprep.subr.mxu0 0.0
    %v657 = vand.u32 %v59, 4294901760
    %v658 = vsub.f32 %v59, %v657
    %659 = vmatpush1.msra.mxu0 %v658
    %660 = vmatprep.subr.mxu0 0.0
    %v661 = vand.u32 %v90, 4294901760
    %v662 = vsub.f32 %v90, %v661
    %663 = vmatpush2.msra.mxu0 %v662
    %664 = vmatprep.subr.mxu0 0.0
    %v665 = vand.u32 %v89, 4294901760
    %v666 = vsub.f32 %v89, %v665
    %667 = vmatpush2.msra.mxu0 %v666
    %668 = vmatprep.subr.mxu0 0.0
    %v669 = vand.u32 %v88, 4294901760
    %v670 = vsub.f32 %v88, %v669
    %671 = vmatpush2.msra.mxu0 %v670
    %672 = vmatprep.subr.mxu0 0.0
    %v673 = vand.u32 %v87, 4294901760
    %v674 = vsub.f32 %v87, %v673
    %675 = vmatpush2.msra.mxu0 %v674
    %676 = vmatprep.subr.mxu0 0.0
    %v677 = vand.u32 %v86, 4294901760
    %v678 = vsub.f32 %v86, %v677
    %679 = vmatpush2.msra.mxu0 %v678
    %680 = vmatprep.subr.mxu0 0.0
    %v681 = vand.u32 %v85, 4294901760
    %v682 = vsub.f32 %v85, %v681
    %683 = vmatpush2.msra.mxu0 %v682
    %684 = vmatprep.subr.mxu0 0.0
    %v685 = vand.u32 %v84, 4294901760
    %v686 = vsub.f32 %v84, %v685
    %687 = vmatpush2.msra.mxu0 %v686
    %688 = vmatprep.subr.mxu0 0.0
    %v689 = vand.u32 %v83, 4294901760
    %v690 = vsub.f32 %v83, %v689
    %691 = vmatpush2.msra.mxu0 %v690
    %692 = vmatprep.subr.mxu0 0.0
    %v693 = vand.u32 %v82, 4294901760
    %v694 = vsub.f32 %v82, %v693
    %695 = vmatpush2.msra.mxu0 %v694
    %696 = vmatprep.subr.mxu0 0.0
    %v697 = vand.u32 %v81, 4294901760
    %v698 = vsub.f32 %v81, %v697
    %699 = vmatpush2.msra.mxu0 %v698
    %700 = vmatprep.subr.mxu0 0.0
    %v701 = vand.u32 %v80, 4294901760
    %v702 = vsub.f32 %v80, %v701
    %703 = vmatpush2.msra.mxu0 %v702
    %704 = vmatprep.subr.mxu0 0.0
    %v705 = vand.u32 %v79, 4294901760
    %v706 = vsub.f32 %v79, %v705
    %707 = vmatpush2.msra.mxu0 %v706
    %708 = vmatprep.subr.mxu0 0.0
    %v709 = vand.u32 %v78, 4294901760
    %v710 = vsub.f32 %v78, %v709
    %711 = vmatpush2.msra.mxu0 %v710
    %712 = vmatprep.subr.mxu0 0.0
    %v713 = vand.u32 %v77, 4294901760
    %v714 = vsub.f32 %v77, %v713
    %715 = vmatpush2.msra.mxu0 %v714
    %716 = vmatprep.subr.mxu0 0.0
    %v717 = vand.u32 %v76, 4294901760
    %v718 = vsub.f32 %v76, %v717
    %719 = vmatpush2.msra.mxu0 %v718
    %720 = vmatprep.subr.mxu0 0.0
    %v721 = vand.u32 %v75, 4294901760
    %v722 = vsub.f32 %v75, %v721
    %723 = vmatpush2.msra.mxu0 %v722
    %v724 = vand.u32 %v44, 4294901760
    %v725 = vsub.f32 %v44, %v724
    %726 = vmatprep.mubr.f32.mxu0 %v725
    %v727 = vand.u32 %v43, 4294901760
    %v728 = vsub.f32 %v43, %v727
    %729 = vmatmul.mubr.f32.gmra.mxu0 %v728
    %v730 = vpop.f32.mrf.mxu0
    %v731 = vadd.f32 %v544, %v730
    %v732 = vpop.f32.mrf.mxu0
    %v733 = vand.u32 %v46, 4294901760
    %v734 = vsub.f32 %v46, %v733
    %735 = vmatprep.mubr.f32.mxu0 %v734
    %v736 = vand.u32 %v45, 4294901760
    %v737 = vsub.f32 %v45, %v736
    %738 = vmatmul.mubr.f32.gmra.mxu0 %v737
    %v739 = vpop.f32.mrf.mxu0
    %v740 = vadd.f32 %v551, %v739
    %v741 = vpop.f32.mrf.mxu0
    %v742 = vand.u32 %v48, 4294901760
    %v743 = vsub.f32 %v48, %v742
    %744 = vmatprep.mubr.f32.mxu0 %v743
    %v745 = vand.u32 %v47, 4294901760
    %v746 = vsub.f32 %v47, %v745
    %747 = vmatmul.mubr.f32.gmra.mxu0 %v746
    %v748 = vpop.f32.mrf.mxu0
    %v749 = vadd.f32 %v558, %v748
    %v750 = vpop.f32.mrf.mxu0
    %v751 = vand.u32 %v50, 4294901760
    %v752 = vsub.f32 %v50, %v751
    %753 = vmatprep.mubr.f32.mxu0 %v752
    %v754 = vand.u32 %v49, 4294901760
    %v755 = vsub.f32 %v49, %v754
    %756 = vmatmul.mubr.f32.gmra.mxu0 %v755
    %v757 = vpop.f32.mrf.mxu0
    %v758 = vadd.f32 %v565, %v757
    %v759 = vpop.f32.mrf.mxu0
    %v760 = vand.u32 %v52, 4294901760
    %v761 = vsub.f32 %v52, %v760
    %762 = vmatprep.mubr.f32.mxu0 %v761
    %v763 = vand.u32 %v51, 4294901760
    %v764 = vsub.f32 %v51, %v763
    %765 = vmatmul.mubr.f32.gmra.mxu0 %v764
    %v766 = vpop.f32.mrf.mxu0
    %v767 = vadd.f32 %v572, %v766
    %v768 = vpop.f32.mrf.mxu0
    %v769 = vand.u32 %v54, 4294901760
    %v770 = vsub.f32 %v54, %v769
    %771 = vmatprep.mubr.f32.mxu0 %v770
    %v772 = vand.u32 %v53, 4294901760
    %v773 = vsub.f32 %v53, %v772
    %774 = vmatmul.mubr.f32.gmra.mxu0 %v773
    %v775 = vpop.f32.mrf.mxu0
    %v776 = vadd.f32 %v579, %v775
    %v777 = vpop.f32.mrf.mxu0
    %v778 = vand.u32 %v56, 4294901760
    %v779 = vsub.f32 %v56, %v778
    %780 = vmatprep.mubr.f32.mxu0 %v779
    %v781 = vand.u32 %v55, 4294901760
    %v782 = vsub.f32 %v55, %v781
    %783 = vmatmul.mubr.f32.gmra.mxu0 %v782
    %v784 = vpop.f32.mrf.mxu0
    %v785 = vadd.f32 %v586, %v784
    %v786 = vpop.f32.mrf.mxu0
    %v787 = vand.u32 %v58, 4294901760
    %v788 = vsub.f32 %v58, %v787
    %789 = vmatprep.mubr.f32.mxu0 %v788
    %v790 = vand.u32 %v57, 4294901760
    %v791 = vsub.f32 %v57, %v790
    %792 = vmatmul.mubr.f32.gmra.mxu0 %v791
    %v793 = vpop.f32.mrf.mxu0
    %v794 = vadd.f32 %v593, %v793
    %v795 = vpop.f32.mrf.mxu0
    %796 = vdwg.mxu0
    %797 = vmatprep.subr.mxu0 0.0
    %v798 = vand.u32 %v74, 4294901760
    %799 = vmatpush1.msra.mxu0 %v798
    %800 = vmatprep.subr.mxu0 0.0
    %v801 = vand.u32 %v73, 4294901760
    %802 = vmatpush1.msra.mxu0 %v801
    %803 = vmatprep.subr.mxu0 0.0
    %v804 = vand.u32 %v72, 4294901760
    %805 = vmatpush1.msra.mxu0 %v804
    %806 = vmatprep.subr.mxu0 0.0
    %v807 = vand.u32 %v71, 4294901760
    %808 = vmatpush1.msra.mxu0 %v807
    %809 = vmatprep.subr.mxu0 0.0
    %v810 = vand.u32 %v70, 4294901760
    %811 = vmatpush1.msra.mxu0 %v810
    %812 = vmatprep.subr.mxu0 0.0
    %v813 = vand.u32 %v69, 4294901760
    %814 = vmatpush1.msra.mxu0 %v813
    %815 = vmatprep.subr.mxu0 0.0
    %v816 = vand.u32 %v68, 4294901760
    %817 = vmatpush1.msra.mxu0 %v816
    %818 = vmatprep.subr.mxu0 0.0
    %v819 = vand.u32 %v67, 4294901760
    %820 = vmatpush1.msra.mxu0 %v819
    %821 = vmatprep.subr.mxu0 0.0
    %v822 = vand.u32 %v66, 4294901760
    %823 = vmatpush1.msra.mxu0 %v822
    %824 = vmatprep.subr.mxu0 0.0
    %v825 = vand.u32 %v65, 4294901760
    %826 = vmatpush1.msra.mxu0 %v825
    %827 = vmatprep.subr.mxu0 0.0
    %v828 = vand.u32 %v64, 4294901760
    %829 = vmatpush1.msra.mxu0 %v828
    %830 = vmatprep.subr.mxu0 0.0
    %v831 = vand.u32 %v63, 4294901760
    %832 = vmatpush1.msra.mxu0 %v831
    %833 = vmatprep.subr.mxu0 0.0
    %v834 = vand.u32 %v62, 4294901760
    %835 = vmatpush1.msra.mxu0 %v834
    %836 = vmatprep.subr.mxu0 0.0
    %v837 = vand.u32 %v61, 4294901760
    %838 = vmatpush1.msra.mxu0 %v837
    %839 = vmatprep.subr.mxu0 0.0
    %v840 = vand.u32 %v60, 4294901760
    %841 = vmatpush1.msra.mxu0 %v840
    %842 = vmatprep.subr.mxu0 0.0
    %v843 = vand.u32 %v59, 4294901760
    %844 = vmatpush1.msra.mxu0 %v843
    %845 = vmatprep.subr.mxu0 0.0
    %v846 = vand.u32 %v90, 4294901760
    %847 = vmatpush2.msra.mxu0 %v846
    %848 = vmatprep.subr.mxu0 0.0
    %v849 = vand.u32 %v89, 4294901760
    %850 = vmatpush2.msra.mxu0 %v849
    %851 = vmatprep.subr.mxu0 0.0
    %v852 = vand.u32 %v88, 4294901760
    %853 = vmatpush2.msra.mxu0 %v852
    %854 = vmatprep.subr.mxu0 0.0
    %v855 = vand.u32 %v87, 4294901760
    %856 = vmatpush2.msra.mxu0 %v855
    %857 = vmatprep.subr.mxu0 0.0
    %v858 = vand.u32 %v86, 4294901760
    %859 = vmatpush2.msra.mxu0 %v858
    %860 = vmatprep.subr.mxu0 0.0
    %v861 = vand.u32 %v85, 4294901760
    %862 = vmatpush2.msra.mxu0 %v861
    %863 = vmatprep.subr.mxu0 0.0
    %v864 = vand.u32 %v84, 4294901760
    %865 = vmatpush2.msra.mxu0 %v864
    %866 = vmatprep.subr.mxu0 0.0
    %v867 = vand.u32 %v83, 4294901760
    %868 = vmatpush2.msra.mxu0 %v867
    %869 = vmatprep.subr.mxu0 0.0
    %v870 = vand.u32 %v82, 4294901760
    %871 = vmatpush2.msra.mxu0 %v870
    %872 = vmatprep.subr.mxu0 0.0
    %v873 = vand.u32 %v81, 4294901760
    %874 = vmatpush2.msra.mxu0 %v873
    %875 = vmatprep.subr.mxu0 0.0
    %v876 = vand.u32 %v80, 4294901760
    %877 = vmatpush2.msra.mxu0 %v876
    %878 = vmatprep.subr.mxu0 0.0
    %v879 = vand.u32 %v79, 4294901760
    %880 = vmatpush2.msra.mxu0 %v879
    %881 = vmatprep.subr.mxu0 0.0
    %v882 = vand.u32 %v78, 4294901760
    %883 = vmatpush2.msra.mxu0 %v882
    %884 = vmatprep.subr.mxu0 0.0
    %v885 = vand.u32 %v77, 4294901760
    %886 = vmatpush2.msra.mxu0 %v885
    %887 = vmatprep.subr.mxu0 0.0
    %v888 = vand.u32 %v76, 4294901760
    %889 = vmatpush2.msra.mxu0 %v888
    %890 = vmatprep.subr.mxu0 0.0
    %v891 = vand.u32 %v75, 4294901760
    %892 = vmatpush2.msra.mxu0 %v891
    %v893 = vand.u32 %v44, 4294901760
    %v894 = vsub.f32 %v44, %v893
    %v895 = vand.u32 %v894, 4294901760
    %896 = vmatprep.mubr.f32.mxu0 %v895
    %v897 = vand.u32 %v43, 4294901760
    %v898 = vsub.f32 %v43, %v897
    %v899 = vand.u32 %v898, 4294901760
    %900 = vmatmul.mubr.f32.gmra.mxu0 %v899
    %v901 = vpop.f32.mrf.mxu0
    %v902 = vadd.f32 %v731, %v901
    %v903 = vpop.f32.mrf.mxu0
    %v904 = vand.u32 %v46, 4294901760
    %v905 = vsub.f32 %v46, %v904
    %v906 = vand.u32 %v905, 4294901760
    %907 = vmatprep.mubr.f32.mxu0 %v906
    %v908 = vand.u32 %v45, 4294901760
    %v909 = vsub.f32 %v45, %v908
    %v910 = vand.u32 %v909, 4294901760
    %911 = vmatmul.mubr.f32.gmra.mxu0 %v910
    %v912 = vpop.f32.mrf.mxu0
    %v913 = vadd.f32 %v740, %v912
    %v914 = vpop.f32.mrf.mxu0
    %v915 = vand.u32 %v48, 4294901760
    %v916 = vsub.f32 %v48, %v915
    %v917 = vand.u32 %v916, 4294901760
    %918 = vmatprep.mubr.f32.mxu0 %v917
    %v919 = vand.u32 %v47, 4294901760
    %v920 = vsub.f32 %v47, %v919
    %v921 = vand.u32 %v920, 4294901760
    %922 = vmatmul.mubr.f32.gmra.mxu0 %v921
    %v923 = vpop.f32.mrf.mxu0
    %v924 = vadd.f32 %v749, %v923
    %v925 = vpop.f32.mrf.mxu0
    %v926 = vand.u32 %v50, 4294901760
    %v927 = vsub.f32 %v50, %v926
    %v928 = vand.u32 %v927, 4294901760
    %929 = vmatprep.mubr.f32.mxu0 %v928
    %v930 = vand.u32 %v49, 4294901760
    %v931 = vsub.f32 %v49, %v930
    %v932 = vand.u32 %v931, 4294901760
    %933 = vmatmul.mubr.f32.gmra.mxu0 %v932
    %v934 = vpop.f32.mrf.mxu0
    %v935 = vadd.f32 %v758, %v934
    %v936 = vpop.f32.mrf.mxu0
    %v937 = vand.u32 %v52, 4294901760
    %v938 = vsub.f32 %v52, %v937
    %v939 = vand.u32 %v938, 4294901760
    %940 = vmatprep.mubr.f32.mxu0 %v939
    %v941 = vand.u32 %v51, 4294901760
    %v942 = vsub.f32 %v51, %v941
    %v943 = vand.u32 %v942, 4294901760
    %944 = vmatmul.mubr.f32.gmra.mxu0 %v943
    %v945 = vpop.f32.mrf.mxu0
    %v946 = vadd.f32 %v767, %v945
    %v947 = vpop.f32.mrf.mxu0
    %v948 = vand.u32 %v54, 4294901760
    %v949 = vsub.f32 %v54, %v948
    %v950 = vand.u32 %v949, 4294901760
    %951 = vmatprep.mubr.f32.mxu0 %v950
    %v952 = vand.u32 %v53, 4294901760
    %v953 = vsub.f32 %v53, %v952
    %v954 = vand.u32 %v953, 4294901760
    %955 = vmatmul.mubr.f32.gmra.mxu0 %v954
    %v956 = vpop.f32.mrf.mxu0
    %v957 = vadd.f32 %v776, %v956
    %v958 = vpop.f32.mrf.mxu0
    %v959 = vand.u32 %v56, 4294901760
    %v960 = vsub.f32 %v56, %v959
    %v961 = vand.u32 %v960, 4294901760
    %962 = vmatprep.mubr.f32.mxu0 %v961
    %v963 = vand.u32 %v55, 4294901760
    %v964 = vsub.f32 %v55, %v963
    %v965 = vand.u32 %v964, 4294901760
    %966 = vmatmul.mubr.f32.gmra.mxu0 %v965
    %v967 = vpop.f32.mrf.mxu0
    %v968 = vadd.f32 %v785, %v967
    %v969 = vpop.f32.mrf.mxu0
    %v970 = vand.u32 %v58, 4294901760
    %v971 = vsub.f32 %v58, %v970
    %v972 = vand.u32 %v971, 4294901760
    %973 = vmatprep.mubr.f32.mxu0 %v972
    %v974 = vand.u32 %v57, 4294901760
    %v975 = vsub.f32 %v57, %v974
    %v976 = vand.u32 %v975, 4294901760
    %977 = vmatmul.mubr.f32.gmra.mxu0 %v976
    %v978 = vpop.f32.mrf.mxu0
    %v979 = vadd.f32 %v794, %v978
    %v980 = vpop.f32.mrf.mxu0
    %981 = vdwg.mxu0
    %982 = vmatprep.subr.mxu0 0.0
    %v983 = vand.u32 %v74, 4294901760
    %v984 = vsub.f32 %v74, %v983
    %v985 = vand.u32 %v984, 4294901760
    %986 = vmatpush1.msra.mxu0 %v985
    %987 = vmatprep.subr.mxu0 0.0
    %v988 = vand.u32 %v73, 4294901760
    %v989 = vsub.f32 %v73, %v988
    %v990 = vand.u32 %v989, 4294901760
    %991 = vmatpush1.msra.mxu0 %v990
    %992 = vmatprep.subr.mxu0 0.0
    %v993 = vand.u32 %v72, 4294901760
    %v994 = vsub.f32 %v72, %v993
    %v995 = vand.u32 %v994, 4294901760
    %996 = vmatpush1.msra.mxu0 %v995
    %997 = vmatprep.subr.mxu0 0.0
    %v998 = vand.u32 %v71, 4294901760
    %v999 = vsub.f32 %v71, %v998
    %v1000 = vand.u32 %v999, 4294901760
    %1001 = vmatpush1.msra.mxu0 %v1000
    %1002 = vmatprep.subr.mxu0 0.0
    %v1003 = vand.u32 %v70, 4294901760
    %v1004 = vsub.f32 %v70, %v1003
    %v1005 = vand.u32 %v1004, 4294901760
    %1006 = vmatpush1.msra.mxu0 %v1005
    %1007 = vmatprep.subr.mxu0 0.0
    %v1008 = vand.u32 %v69, 4294901760
    %v1009 = vsub.f32 %v69, %v1008
    %v1010 = vand.u32 %v1009, 4294901760
    %1011 = vmatpush1.msra.mxu0 %v1010
    %1012 = vmatprep.subr.mxu0 0.0
    %v1013 = vand.u32 %v68, 4294901760
    %v1014 = vsub.f32 %v68, %v1013
    %v1015 = vand.u32 %v1014, 4294901760
    %1016 = vmatpush1.msra.mxu0 %v1015
    %1017 = vmatprep.subr.mxu0 0.0
    %v1018 = vand.u32 %v67, 4294901760
    %v1019 = vsub.f32 %v67, %v1018
    %v1020 = vand.u32 %v1019, 4294901760
    %1021 = vmatpush1.msra.mxu0 %v1020
    %1022 = vmatprep.subr.mxu0 0.0
    %v1023 = vand.u32 %v66, 4294901760
    %v1024 = vsub.f32 %v66, %v1023
    %v1025 = vand.u32 %v1024, 4294901760
    %1026 = vmatpush1.msra.mxu0 %v1025
    %1027 = vmatprep.subr.mxu0 0.0
    %v1028 = vand.u32 %v65, 4294901760
    %v1029 = vsub.f32 %v65, %v1028
    %v1030 = vand.u32 %v1029, 4294901760
    %1031 = vmatpush1.msra.mxu0 %v1030
    %1032 = vmatprep.subr.mxu0 0.0
    %v1033 = vand.u32 %v64, 4294901760
    %v1034 = vsub.f32 %v64, %v1033
    %v1035 = vand.u32 %v1034, 4294901760
    %1036 = vmatpush1.msra.mxu0 %v1035
    %1037 = vmatprep.subr.mxu0 0.0
    %v1038 = vand.u32 %v63, 4294901760
    %v1039 = vsub.f32 %v63, %v1038
    %v1040 = vand.u32 %v1039, 4294901760
    %1041 = vmatpush1.msra.mxu0 %v1040
    %1042 = vmatprep.subr.mxu0 0.0
    %v1043 = vand.u32 %v62, 4294901760
    %v1044 = vsub.f32 %v62, %v1043
    %v1045 = vand.u32 %v1044, 4294901760
    %1046 = vmatpush1.msra.mxu0 %v1045
    %1047 = vmatprep.subr.mxu0 0.0
    %v1048 = vand.u32 %v61, 4294901760
    %v1049 = vsub.f32 %v61, %v1048
    %v1050 = vand.u32 %v1049, 4294901760
    %1051 = vmatpush1.msra.mxu0 %v1050
    %1052 = vmatprep.subr.mxu0 0.0
    %v1053 = vand.u32 %v60, 4294901760
    %v1054 = vsub.f32 %v60, %v1053
    %v1055 = vand.u32 %v1054, 4294901760
    %1056 = vmatpush1.msra.mxu0 %v1055
    %1057 = vmatprep.subr.mxu0 0.0
    %v1058 = vand.u32 %v59, 4294901760
    %v1059 = vsub.f32 %v59, %v1058
    %v1060 = vand.u32 %v1059, 4294901760
    %1061 = vmatpush1.msra.mxu0 %v1060
    %1062 = vmatprep.subr.mxu0 0.0
    %v1063 = vand.u32 %v90, 4294901760
    %v1064 = vsub.f32 %v90, %v1063
    %v1065 = vand.u32 %v1064, 4294901760
    %1066 = vmatpush2.msra.mxu0 %v1065
    %1067 = vmatprep.subr.mxu0 0.0
    %v1068 = vand.u32 %v89, 4294901760
    %v1069 = vsub.f32 %v89, %v1068
    %v1070 = vand.u32 %v1069, 4294901760
    %1071 = vmatpush2.msra.mxu0 %v1070
    %1072 = vmatprep.subr.mxu0 0.0
    %v1073 = vand.u32 %v88, 4294901760
    %v1074 = vsub.f32 %v88, %v1073
    %v1075 = vand.u32 %v1074, 4294901760
    %1076 = vmatpush2.msra.mxu0 %v1075
    %1077 = vmatprep.subr.mxu0 0.0
    %v1078 = vand.u32 %v87, 4294901760
    %v1079 = vsub.f32 %v87, %v1078
    %v1080 = vand.u32 %v1079, 4294901760
    %1081 = vmatpush2.msra.mxu0 %v1080
    %1082 = vmatprep.subr.mxu0 0.0
    %v1083 = vand.u32 %v86, 4294901760
    %v1084 = vsub.f32 %v86, %v1083
    %v1085 = vand.u32 %v1084, 4294901760
    %1086 = vmatpush2.msra.mxu0 %v1085
    %1087 = vmatprep.subr.mxu0 0.0
    %v1088 = vand.u32 %v85, 4294901760
    %v1089 = vsub.f32 %v85, %v1088
    %v1090 = vand.u32 %v1089, 4294901760
    %1091 = vmatpush2.msra.mxu0 %v1090
    %1092 = vmatprep.subr.mxu0 0.0
    %v1093 = vand.u32 %v84, 4294901760
    %v1094 = vsub.f32 %v84, %v1093
    %v1095 = vand.u32 %v1094, 4294901760
    %1096 = vmatpush2.msra.mxu0 %v1095
    %1097 = vmatprep.subr.mxu0 0.0
    %v1098 = vand.u32 %v83, 4294901760
    %v1099 = vsub.f32 %v83, %v1098
    %v1100 = vand.u32 %v1099, 4294901760
    %1101 = vmatpush2.msra.mxu0 %v1100
    %1102 = vmatprep.subr.mxu0 0.0
    %v1103 = vand.u32 %v82, 4294901760
    %v1104 = vsub.f32 %v82, %v1103
    %v1105 = vand.u32 %v1104, 4294901760
    %1106 = vmatpush2.msra.mxu0 %v1105
    %1107 = vmatprep.subr.mxu0 0.0
    %v1108 = vand.u32 %v81, 4294901760
    %v1109 = vsub.f32 %v81, %v1108
    %v1110 = vand.u32 %v1109, 4294901760
    %1111 = vmatpush2.msra.mxu0 %v1110
    %1112 = vmatprep.subr.mxu0 0.0
    %v1113 = vand.u32 %v80, 4294901760
    %v1114 = vsub.f32 %v80, %v1113
    %v1115 = vand.u32 %v1114, 4294901760
    %1116 = vmatpush2.msra.mxu0 %v1115
    %1117 = vmatprep.subr.mxu0 0.0
    %v1118 = vand.u32 %v79, 4294901760
    %v1119 = vsub.f32 %v79, %v1118
    %v1120 = vand.u32 %v1119, 4294901760
    %1121 = vmatpush2.msra.mxu0 %v1120
    %1122 = vmatprep.subr.mxu0 0.0
    %v1123 = vand.u32 %v78, 4294901760
    %v1124 = vsub.f32 %v78, %v1123
    %v1125 = vand.u32 %v1124, 4294901760
    %1126 = vmatpush2.msra.mxu0 %v1125
    %1127 = vmatprep.subr.mxu0 0.0
    %v1128 = vand.u32 %v77, 4294901760
    %v1129 = vsub.f32 %v77, %v1128
    %v1130 = vand.u32 %v1129, 4294901760
    %1131 = vmatpush2.msra.mxu0 %v1130
    %1132 = vmatprep.subr.mxu0 0.0
    %v1133 = vand.u32 %v76, 4294901760
    %v1134 = vsub.f32 %v76, %v1133
    %v1135 = vand.u32 %v1134, 4294901760
    %1136 = vmatpush2.msra.mxu0 %v1135
    %1137 = vmatprep.subr.mxu0 0.0
    %v1138 = vand.u32 %v75, 4294901760
    %v1139 = vsub.f32 %v75, %v1138
    %v1140 = vand.u32 %v1139, 4294901760
    %1141 = vmatpush2.msra.mxu0 %v1140
    %v1142 = vand.u32 %v44, 4294901760
    %1143 = vmatprep.mubr.f32.mxu0 %v1142
    %v1144 = vand.u32 %v43, 4294901760
    %1145 = vmatmul.mubr.f32.gmra.mxu0 %v1144
    %v1146 = vpop.f32.mrf.mxu0
    %v1147 = vadd.f32 %v902, %v1146
    %v1148 = vpop.f32.mrf.mxu0
    %v1149 = vand.u32 %v46, 4294901760
    %1150 = vmatprep.mubr.f32.mxu0 %v1149
    %v1151 = vand.u32 %v45, 4294901760
    %1152 = vmatmul.mubr.f32.gmra.mxu0 %v1151
    %v1153 = vpop.f32.mrf.mxu0
    %v1154 = vadd.f32 %v913, %v1153
    %v1155 = vpop.f32.mrf.mxu0
    %v1156 = vand.u32 %v48, 4294901760
    %1157 = vmatprep.mubr.f32.mxu0 %v1156
    %v1158 = vand.u32 %v47, 4294901760
    %1159 = vmatmul.mubr.f32.gmra.mxu0 %v1158
    %v1160 = vpop.f32.mrf.mxu0
    %v1161 = vadd.f32 %v924, %v1160
    %v1162 = vpop.f32.mrf.mxu0
    %v1163 = vand.u32 %v50, 4294901760
    %1164 = vmatprep.mubr.f32.mxu0 %v1163
    %v1165 = vand.u32 %v49, 4294901760
    %1166 = vmatmul.mubr.f32.gmra.mxu0 %v1165
    %v1167 = vpop.f32.mrf.mxu0
    %v1168 = vadd.f32 %v935, %v1167
    %v1169 = vpop.f32.mrf.mxu0
    %v1170 = vand.u32 %v52, 4294901760
    %1171 = vmatprep.mubr.f32.mxu0 %v1170
    %v1172 = vand.u32 %v51, 4294901760
    %1173 = vmatmul.mubr.f32.gmra.mxu0 %v1172
    %v1174 = vpop.f32.mrf.mxu0
    %v1175 = vadd.f32 %v946, %v1174
    %v1176 = vpop.f32.mrf.mxu0
    %v1177 = vand.u32 %v54, 4294901760
    %1178 = vmatprep.mubr.f32.mxu0 %v1177
    %v1179 = vand.u32 %v53, 4294901760
    %1180 = vmatmul.mubr.f32.gmra.mxu0 %v1179
    %v1181 = vpop.f32.mrf.mxu0
    %v1182 = vadd.f32 %v957, %v1181
    %v1183 = vpop.f32.mrf.mxu0
    %v1184 = vand.u32 %v56, 4294901760
    %1185 = vmatprep.mubr.f32.mxu0 %v1184
    %v1186 = vand.u32 %v55, 4294901760
    %1187 = vmatmul.mubr.f32.gmra.mxu0 %v1186
    %v1188 = vpop.f32.mrf.mxu0
    %v1189 = vadd.f32 %v968, %v1188
    %v1190 = vpop.f32.mrf.mxu0
    %v1191 = vand.u32 %v58, 4294901760
    %1192 = vmatprep.mubr.f32.mxu0 %v1191
    %v1193 = vand.u32 %v57, 4294901760
    %1194 = vmatmul.mubr.f32.gmra.mxu0 %v1193
    %v1195 = vpop.f32.mrf.mxu0
    %v1196 = vadd.f32 %v979, %v1195
    %v1197 = vpop.f32.mrf.mxu0
    %1198 = vdwg.mxu0
    %1199 = vmatprep.subr.mxu0 0.0
    %v1200 = vand.u32 %v74, 4294901760
    %1201 = vmatpush1.msra.mxu0 %v1200
    %1202 = vmatprep.subr.mxu0 0.0
    %v1203 = vand.u32 %v73, 4294901760
    %1204 = vmatpush1.msra.mxu0 %v1203
    %1205 = vmatprep.subr.mxu0 0.0
    %v1206 = vand.u32 %v72, 4294901760
    %1207 = vmatpush1.msra.mxu0 %v1206
    %1208 = vmatprep.subr.mxu0 0.0
    %v1209 = vand.u32 %v71, 4294901760
    %1210 = vmatpush1.msra.mxu0 %v1209
    %1211 = vmatprep.subr.mxu0 0.0
    %v1212 = vand.u32 %v70, 4294901760
    %1213 = vmatpush1.msra.mxu0 %v1212
    %1214 = vmatprep.subr.mxu0 0.0
    %v1215 = vand.u32 %v69, 4294901760
    %1216 = vmatpush1.msra.mxu0 %v1215
    %1217 = vmatprep.subr.mxu0 0.0
    %v1218 = vand.u32 %v68, 4294901760
    %1219 = vmatpush1.msra.mxu0 %v1218
    %1220 = vmatprep.subr.mxu0 0.0
    %v1221 = vand.u32 %v67, 4294901760
    %1222 = vmatpush1.msra.mxu0 %v1221
    %1223 = vmatprep.subr.mxu0 0.0
    %v1224 = vand.u32 %v66, 4294901760
    %1225 = vmatpush1.msra.mxu0 %v1224
    %1226 = vmatprep.subr.mxu0 0.0
    %v1227 = vand.u32 %v65, 4294901760
    %1228 = vmatpush1.msra.mxu0 %v1227
    %1229 = vmatprep.subr.mxu0 0.0
    %v1230 = vand.u32 %v64, 4294901760
    %1231 = vmatpush1.msra.mxu0 %v1230
    %1232 = vmatprep.subr.mxu0 0.0
    %v1233 = vand.u32 %v63, 4294901760
    %1234 = vmatpush1.msra.mxu0 %v1233
    %1235 = vmatprep.subr.mxu0 0.0
    %v1236 = vand.u32 %v62, 4294901760
    %1237 = vmatpush1.msra.mxu0 %v1236
    %1238 = vmatprep.subr.mxu0 0.0
    %v1239 = vand.u32 %v61, 4294901760
    %1240 = vmatpush1.msra.mxu0 %v1239
    %1241 = vmatprep.subr.mxu0 0.0
    %v1242 = vand.u32 %v60, 4294901760
    %1243 = vmatpush1.msra.mxu0 %v1242
    %1244 = vmatprep.subr.mxu0 0.0
    %v1245 = vand.u32 %v59, 4294901760
    %1246 = vmatpush1.msra.mxu0 %v1245
    %1247 = vmatprep.subr.mxu0 0.0
    %v1248 = vand.u32 %v90, 4294901760
    %1249 = vmatpush2.msra.mxu0 %v1248
    %1250 = vmatprep.subr.mxu0 0.0
    %v1251 = vand.u32 %v89, 4294901760
    %1252 = vmatpush2.msra.mxu0 %v1251
    %1253 = vmatprep.subr.mxu0 0.0
    %v1254 = vand.u32 %v88, 4294901760
    %1255 = vmatpush2.msra.mxu0 %v1254
    %1256 = vmatprep.subr.mxu0 0.0
    %v1257 = vand.u32 %v87, 4294901760
    %1258 = vmatpush2.msra.mxu0 %v1257
    %1259 = vmatprep.subr.mxu0 0.0
    %v1260 = vand.u32 %v86, 4294901760
    %1261 = vmatpush2.msra.mxu0 %v1260
    %1262 = vmatprep.subr.mxu0 0.0
    %v1263 = vand.u32 %v85, 4294901760
    %1264 = vmatpush2.msra.mxu0 %v1263
    %1265 = vmatprep.subr.mxu0 0.0
    %v1266 = vand.u32 %v84, 4294901760
    %1267 = vmatpush2.msra.mxu0 %v1266
    %1268 = vmatprep.subr.mxu0 0.0
    %v1269 = vand.u32 %v83, 4294901760
    %1270 = vmatpush2.msra.mxu0 %v1269
    %1271 = vmatprep.subr.mxu0 0.0
    %v1272 = vand.u32 %v82, 4294901760
    %1273 = vmatpush2.msra.mxu0 %v1272
    %1274 = vmatprep.subr.mxu0 0.0
    %v1275 = vand.u32 %v81, 4294901760
    %1276 = vmatpush2.msra.mxu0 %v1275
    %1277 = vmatprep.subr.mxu0 0.0
    %v1278 = vand.u32 %v80, 4294901760
    %1279 = vmatpush2.msra.mxu0 %v1278
    %1280 = vmatprep.subr.mxu0 0.0
    %v1281 = vand.u32 %v79, 4294901760
    %1282 = vmatpush2.msra.mxu0 %v1281
    %1283 = vmatprep.subr.mxu0 0.0
    %v1284 = vand.u32 %v78, 4294901760
    %1285 = vmatpush2.msra.mxu0 %v1284
    %1286 = vmatprep.subr.mxu0 0.0
    %v1287 = vand.u32 %v77, 4294901760
    %1288 = vmatpush2.msra.mxu0 %v1287
    %1289 = vmatprep.subr.mxu0 0.0
    %v1290 = vand.u32 %v76, 4294901760
    %1291 = vmatpush2.msra.mxu0 %v1290
    %1292 = vmatprep.subr.mxu0 0.0
    %v1293 = vand.u32 %v75, 4294901760
    %1294 = vmatpush2.msra.mxu0 %v1293
    %v1295 = vand.u32 %v44, 4294901760
    %1296 = vmatprep.mubr.f32.mxu0 %v1295
    %v1297 = vand.u32 %v43, 4294901760
    %1298 = vmatmul.mubr.f32.gmra.mxu0 %v1297
    %v1299 = vpop.f32.mrf.mxu0
    %v1300 = vadd.f32 %v1147, %v1299
    %v1301 = vpop.f32.mrf.mxu0
    %v1302 = vand.u32 %v46, 4294901760
    %1303 = vmatprep.mubr.f32.mxu0 %v1302
    %v1304 = vand.u32 %v45, 4294901760
    %1305 = vmatmul.mubr.f32.gmra.mxu0 %v1304
    %v1306 = vpop.f32.mrf.mxu0
    %v1307 = vadd.f32 %v1154, %v1306
    %v1308 = vpop.f32.mrf.mxu0
    %v1309 = vand.u32 %v48, 4294901760
    %1310 = vmatprep.mubr.f32.mxu0 %v1309
    %v1311 = vand.u32 %v47, 4294901760
    %1312 = vmatmul.mubr.f32.gmra.mxu0 %v1311
    %v1313 = vpop.f32.mrf.mxu0
    %v1314 = vadd.f32 %v1161, %v1313
    %v1315 = vpop.f32.mrf.mxu0
    %v1316 = vand.u32 %v50, 4294901760
    %1317 = vmatprep.mubr.f32.mxu0 %v1316
    %v1318 = vand.u32 %v49, 4294901760
    %1319 = vmatmul.mubr.f32.gmra.mxu0 %v1318
    %v1320 = vpop.f32.mrf.mxu0
    %v1321 = vadd.f32 %v1168, %v1320
    %v1322 = vpop.f32.mrf.mxu0
    %v1323 = vand.u32 %v52, 4294901760
    %1324 = vmatprep.mubr.f32.mxu0 %v1323
    %v1325 = vand.u32 %v51, 4294901760
    %1326 = vmatmul.mubr.f32.gmra.mxu0 %v1325
    %v1327 = vpop.f32.mrf.mxu0
    %v1328 = vadd.f32 %v1175, %v1327
    %v1329 = vpop.f32.mrf.mxu0
    %v1330 = vand.u32 %v54, 4294901760
    %1331 = vmatprep.mubr.f32.mxu0 %v1330
    %v1332 = vand.u32 %v53, 4294901760
    %1333 = vmatmul.mubr.f32.gmra.mxu0 %v1332
    %v1334 = vpop.f32.mrf.mxu0
    %v1335 = vadd.f32 %v1182, %v1334
    %v1336 = vpop.f32.mrf.mxu0
    %v1337 = vand.u32 %v56, 4294901760
    %1338 = vmatprep.mubr.f32.mxu0 %v1337
    %v1339 = vand.u32 %v55, 4294901760
    %1340 = vmatmul.mubr.f32.gmra.mxu0 %v1339
    %v1341 = vpop.f32.mrf.mxu0
    %v1342 = vadd.f32 %v1189, %v1341
    %v1343 = vpop.f32.mrf.mxu0
    %v1344 = vand.u32 %v58, 4294901760
    %1345 = vmatprep.mubr.f32.mxu0 %v1344
    %v1346 = vand.u32 %v57, 4294901760
    %1347 = vmatmul.mubr.f32.gmra.mxu0 %v1346
    %v1348 = vpop.f32.mrf.mxu0
    %v1349 = vadd.f32 %v1196, %v1348
    %v1350 = vpop.f32.mrf.mxu0
    %1351 = vdwg.mxu0
    %1352 = vst [vmem:[#allocation7] sm:$0xff] %v1300
    %1353 = vst [vmem:[#allocation7 + $0x8] sm:$0xff] %v1307
    %1354 = vst [vmem:[#allocation7 + $0x10] sm:$0xff] %v1314
    %1355 = vst [vmem:[#allocation7 + $0x18] sm:$0xff] %v1321
    %1356 = vst [vmem:[#allocation7 + $0x20] sm:$0xff] %v1328
    %1357 = vst [vmem:[#allocation7 + $0x28] sm:$0xff] %v1335
    %1358 = vst [vmem:[#allocation7 + $0x30] sm:$0xff] %v1342
    %1359 = vst [vmem:[#allocation7 + $0x38] sm:$0xff] %v1349
    // Predicated region
    $region22: #{tpu_custom_call.1} parent=1 // pred_check
      _
    $region23: #{tpu_custom_call.1} parent=1 // pred_check_branch
      %1361 = sbr.rel (0) target = $region25
    $region24: #{tpu_custom_call.1} parent=1 // pred_region
      %s1363 = ssub.s32 1024, 1024
      %1364 = vsyncadd [#allocation4], %s1363
      %s1365 = sshll.u32 [#allocation7], 4
      %s1366 = int_to_ptr.vmem [resolvable:$true] %s1365
      %1371 = dma.vmem_to_hbm [thread:$0]  %s1366, 1024, %s3, [#allocation4], 128, 128, 8
    $region25: #{tpu_custom_call.1} parent=1 // pred_fallthru
      _
    // Predicated region
    $region26: #{tpu_custom_call.1} parent=1 // pred_check
      _
    $region27: #{tpu_custom_call.1} parent=1 // pred_check_branch
      %1373 = sbr.rel (0) target = $region29
    $region28: #{tpu_custom_call.1} parent=1 // pred_region
      %1374 = dma.done [#allocation4], 1024
    $region29: #{tpu_custom_call.1} parent=1 // pred_fallthru
      _
    %1375 = vsyncpa [#allocation3], 1
    %1376 = vsyncpa [#allocation6], 1
    %1377 = vsyncpa [#allocation4], 1

</llo_original>
